<compile_context>
chip_gen: v7x
topology: tpu7x:2x2x1
jax: 0.10.0
libtpu: 0.0.40
codegen_flags: <defaults>
</compile_context>

<pallas_src>
import jax
import jax.numpy as jnp
from jax.experimental import pallas as pl
from jax.experimental.pallas import tpu as pltpu


def _leaky_relu(x, slope=0.2):
    return jnp.where(x > 0, x, slope * x)


def _round_up(n, m):
    return ((n + m - 1) // m) * m


def _cdiv(a, b):
    return (a + b - 1) // b


def _pad_to(a, shape):
    pads = [(0, t - s) for s, t in zip(a.shape, shape)]
    if any(p[1] for p in pads):
        return jnp.pad(a, pads)
    return a


def generator_kernel(x_ref, w1_ref, b1_ref, w2_ref, b2_ref, w3_ref, b3_ref,
                     o_ref, h2_ref):
    # Layers 0-3 only depend on the batch tile -> compute once per batch tile
    # (inner N axis iterates fastest, so j == 0 happens first for each i).
    @pl.when(pl.program_id(1) == 0)
    def _():
        h1 = jnp.dot(x_ref[...], w1_ref[...],
                     preferred_element_type=jnp.float32)
        h1 = _leaky_relu(h1 + b1_ref[...])                       # f32 math
        h2 = jnp.dot(h1.astype(jnp.bfloat16), w2_ref[...],
                     preferred_element_type=jnp.float32)
        h2 = _leaky_relu(h2 + b2_ref[...])
        h2_ref[...] = h2.astype(jnp.bfloat16)                    # keep resident

    # Layer 4 on the current (512, TN) weight slab + Tanh.
    h3 = jnp.dot(h2_ref[...], w3_ref[...],
                 preferred_element_type=jnp.float32)
    h3 = h3 + b3_ref[...]
    o_ref[...] = jnp.tanh(h3).astype(o_ref.dtype)


def generator_forward(x, params, out_image_size, *, max_tb=256, max_tn=2048):
    """x: (B, z_dim) float32 latent. Returns (B, C, H, W) float32."""
    w1, b1, w2, b2, w3, b3 = params
    B, z_dim = x.shape
    C, H, W = out_image_size
    view_size = C * H * W
    h1_dim = w1.shape[1]          # 256
    h2_dim = w2.shape[1]          # 512

    # --- batch tiling (multiple of 16 for bf16 sublane packing) -------------
    TB = min(max_tb, _round_up(B, 16))
    B_pad = _round_up(B, TB)

    # --- output-N tiling (lane-dense: multiple of 128) -----------------------
    V_128 = _round_up(view_size, 128)
    n_tiles = _cdiv(V_128, max_tn)
    TN = _round_up(_cdiv(V_128, n_tiles), 128)
    V_pad = n_tiles * TN

    # --- cast / pad operands (bf16 weights & activations, f32 biases) --------
    bf = jnp.bfloat16
    xb = _pad_to(x.astype(bf), (B_pad, z_dim))
    w1b, w2b = w1.astype(bf), w2.astype(bf)
    w3b = _pad_to(w3.astype(bf), (h2_dim, V_pad))
    b1f, b2f = b1.astype(jnp.float32), b2.astype(jnp.float32)
    b3f = _pad_to(b3.astype(jnp.float32), (1, V_pad))

    grid = (B_pad // TB, V_pad // TN)

    flops = 2 * B_pad * (z_dim * h1_dim + h1_dim * h2_dim + h2_dim * V_pad)
    bytes_accessed = (xb.size * 2 + w1b.size * 2 + w2b.size * 2 + w3b.size * 2
                      + b1f.size * 4 + b2f.size * 4 + b3f.size * 4
                      + B_pad * V_pad * 4)
    transcendentals = B_pad * V_pad

    out = pl.pallas_call(
        generator_kernel,
        out_shape=jax.ShapeDtypeStruct((B_pad, V_pad), jnp.float32),
        grid_spec=pltpu.PrefetchScalarGridSpec(
            num_scalar_prefetch=0,
            grid=grid,
            in_specs=[
                pl.BlockSpec((TB, z_dim),     lambda i, j: (i, 0)),   # x
                pl.BlockSpec((z_dim, h1_dim), lambda i, j: (0, 0)),   # w1 (resident)
                pl.BlockSpec((1, h1_dim),     lambda i, j: (0, 0)),   # b1
                pl.BlockSpec((h1_dim, h2_dim), lambda i, j: (0, 0)),  # w2 (resident)
                pl.BlockSpec((1, h2_dim),     lambda i, j: (0, 0)),   # b2
                pl.BlockSpec((h2_dim, TN),    lambda i, j: (0, j)),   # w3 slab
                pl.BlockSpec((1, TN),         lambda i, j: (0, j)),   # b3 slab
            ],
            out_specs=pl.BlockSpec((TB, TN), lambda i, j: (i, j)),
            scratch_shapes=[pltpu.VMEM((TB, h2_dim), jnp.bfloat16)],  # h2
        ),
        compiler_params=pltpu.CompilerParams(
            dimension_semantics=("parallel", "arbitrary")),
        cost_estimate=pl.CostEstimate(flops=flops,
                                      transcendentals=transcendentals,
                                      bytes_accessed=bytes_accessed),
    )(xb, w1b, b1f, w2b, b2f, w3b, b3f)

    return out[:B, :view_size].reshape(B, C, H, W)


def init_params(key, z_dim, view_image_size):
    """Deterministic init mimicking nn.Linear's uniform(-1/sqrt(fan_in), +1/sqrt(fan_in))."""
    def linear(key, fan_in, fan_out):
        kw, kb = jax.random.split(key)
        bound = 1.0 / jnp.sqrt(fan_in)
        w = jax.random.uniform(kw, (fan_in, fan_out), jnp.float32, -bound, bound)
        b = jax.random.uniform(kb, (1, fan_out), jnp.float32, -bound, bound)
        return w, b

    k1, k2, k3 = jax.random.split(key, 3)
    w1, b1 = linear(k1, z_dim, 256)
    w2, b2 = linear(k2, 256, 512)
    w3, b3 = linear(k3, 512, view_image_size)
    return (w1, b1, w2, b2, w3, b3)


def reference_forward(x, params, out_image_size):
    """Pure-JAX reference mirroring the kernel's mixed precision (bf16 ins, f32 acc)."""
    w1, b1, w2, b2, w3, b3 = params
    bf = jnp.bfloat16
    h = jnp.dot(x.astype(bf), w1.astype(bf),
                preferred_element_type=jnp.float32) + b1
    h = jnp.where(h > 0, h, 0.2 * h)
    h = jnp.dot(h.astype(bf), w2.astype(bf),
                preferred_element_type=jnp.float32) + b2
    h = jnp.where(h > 0, h, 0.2 * h)
    o = jnp.tanh(jnp.dot(h.astype(bf), w3.astype(bf),
                         preferred_element_type=jnp.float32) + b3)
    return o.reshape(x.shape[0], *out_image_size)


if __name__ == "__main__":
    z_dim = 32
    target_image_size = (3, 16, 16)          # (C, H, W)
    batch = 2
    view_size = target_image_size[0] * target_image_size[1] * target_image_size[2]

    key = jax.random.PRNGKey(0)
    k_params, k_x = jax.random.split(key)
    params = init_params(k_params, z_dim, view_size)
    x = jax.random.normal(k_x, (batch, z_dim), jnp.float32)

    out = generator_forward(x, params, target_image_size)
    out = jax.block_until_ready(out)

    ref = reference_forward(x, params, target_image_size)
    assert out.shape == (batch, *target_image_size), out.shape
    err = float(jnp.max(jnp.abs(out - ref)))
    assert jnp.allclose(out, ref, atol=1e-2, rtol=1e-2), f"mismatch vs reference, max abs err {err}"

    print("KERNEL_OK")
</pallas_src>

<mosaic_0001>
module attributes {stable_mosaic.version = 11 : i64} {
  func.func @generator_kernel(%arg0: i32, %arg1: i32, %arg2: memref<16x32xbf16, #tpu.memory_space<vmem>>, %arg3: memref<32x256xbf16, #tpu.memory_space<vmem>>, %arg4: memref<1x256xf32, #tpu.memory_space<vmem>>, %arg5: memref<256x512xbf16, #tpu.memory_space<vmem>>, %arg6: memref<1x512xf32, #tpu.memory_space<vmem>>, %arg7: memref<512x768xbf16, #tpu.memory_space<vmem>>, %arg8: memref<1x768xf32, #tpu.memory_space<vmem>>, %arg9: memref<16x768xf32, #tpu.memory_space<vmem>>, %arg10: memref<16x512xbf16, #tpu.memory_space<vmem>>) attributes {dimension_semantics = [#tpu.dimension_semantics<parallel>, #tpu.dimension_semantics<arbitrary>], iteration_bounds = array<i64: 1, 1>, scalar_prefetch = 0 : i64, scratch_operands = 1 : i64, tpu.core_type = #tpu.core_type<tc>, window_params = [{transform_indices = @transform_0, window_bounds = array<i64: 16, 32>}, {pipeline_mode = #tpu.pipeline_mode<synchronous>, transform_indices = @transform_1, window_bounds = array<i64: 32, 256>}, {pipeline_mode = #tpu.pipeline_mode<synchronous>, transform_indices = @transform_2, window_bounds = array<i64: 1, 256>}, {pipeline_mode = #tpu.pipeline_mode<synchronous>, transform_indices = @transform_3, window_bounds = array<i64: 256, 512>}, {pipeline_mode = #tpu.pipeline_mode<synchronous>, transform_indices = @transform_4, window_bounds = array<i64: 1, 512>}, {transform_indices = @transform_5, window_bounds = array<i64: 512, 768>}, {transform_indices = @transform_6, window_bounds = array<i64: 1, 768>}, {transform_indices = @transform_7, window_bounds = array<i64: 16, 768>}]} {
    %c0_i32 = arith.constant 0 : i32
    %0 = arith.cmpi eq, %arg1, %c0_i32 : i32
    %1 = arith.extui %0 : i1 to i32
    %c0_i32_0 = arith.constant 0 : i32
    %2 = arith.cmpi ne, %1, %c0_i32_0 : i32
    scf.if %2 {
      %c0_8 = arith.constant 0 : index
      %c0_9 = arith.constant 0 : index
      %11 = vector.load %arg2[%c0_8, %c0_9] : memref<16x32xbf16, #tpu.memory_space<vmem>>, vector<16x32xbf16>
      %c0_10 = arith.constant 0 : index
      %c0_11 = arith.constant 0 : index
      %12 = vector.load %arg3[%c0_10, %c0_11] : memref<32x256xbf16, #tpu.memory_space<vmem>>, vector<32x256xbf16>
      %cst_12 = arith.constant dense<0.000000e+00> : vector<16x256xf32>
      %13 = tpu.matmul %11, %12, %cst_12 {dimension_numbers = #tpu.dot_dimension_numbers<[1], [0], [0], [1], [0, 0, 1, 1], [], []>} : vector<16x32xbf16>, vector<32x256xbf16>, vector<16x256xf32> -> vector<16x256xf32>
      %c0_13 = arith.constant 0 : index
      %c0_14 = arith.constant 0 : index
      %14 = vector.load %arg4[%c0_13, %c0_14] : memref<1x256xf32, #tpu.memory_space<vmem>>, vector<1x256xf32>
      %15 = vector.broadcast %14 : vector<1x256xf32> to vector<16x256xf32>
      %16 = arith.addf %13, %15 : vector<16x256xf32>
      %cst_15 = arith.constant 0.000000e+00 : f32
      %17 = vector.broadcast %cst_15 : f32 to vector<16x256xf32>
      %18 = arith.cmpf ogt, %16, %17 : vector<16x256xf32>
      %cst_16 = arith.constant 2.000000e-01 : f32
      %19 = vector.broadcast %cst_16 : f32 to vector<16x256xf32>
      %20 = arith.mulf %19, %16 : vector<16x256xf32>
      %21 = arith.select %18, %16, %20 : vector<16x256xi1>, vector<16x256xf32>
      %22 = arith.truncf %21 : vector<16x256xf32> to vector<16x256xbf16>
      %c0_17 = arith.constant 0 : index
      %c0_18 = arith.constant 0 : index
      %23 = vector.load %arg5[%c0_17, %c0_18] : memref<256x512xbf16, #tpu.memory_space<vmem>>, vector<256x512xbf16>
      %cst_19 = arith.constant dense<0.000000e+00> : vector<16x512xf32>
      %24 = tpu.matmul %22, %23, %cst_19 {dimension_numbers = #tpu.dot_dimension_numbers<[1], [0], [0], [1], [0, 0, 1, 1], [], []>} : vector<16x256xbf16>, vector<256x512xbf16>, vector<16x512xf32> -> vector<16x512xf32>
      %c0_20 = arith.constant 0 : index
      %c0_21 = arith.constant 0 : index
      %25 = vector.load %arg6[%c0_20, %c0_21] : memref<1x512xf32, #tpu.memory_space<vmem>>, vector<1x512xf32>
      %26 = vector.broadcast %25 : vector<1x512xf32> to vector<16x512xf32>
      %27 = arith.addf %24, %26 : vector<16x512xf32>
      %cst_22 = arith.constant 0.000000e+00 : f32
      %28 = vector.broadcast %cst_22 : f32 to vector<16x512xf32>
      %29 = arith.cmpf ogt, %27, %28 : vector<16x512xf32>
      %cst_23 = arith.constant 2.000000e-01 : f32
      %30 = vector.broadcast %cst_23 : f32 to vector<16x512xf32>
      %31 = arith.mulf %30, %27 : vector<16x512xf32>
      %32 = arith.select %29, %27, %31 : vector<16x512xi1>, vector<16x512xf32>
      %33 = arith.truncf %32 : vector<16x512xf32> to vector<16x512xbf16>
      %c0_24 = arith.constant 0 : index
      %c0_25 = arith.constant 0 : index
      %34 = vector.load %arg10[%c0_24, %c0_25] : memref<16x512xbf16, #tpu.memory_space<vmem>>, vector<16x512xbf16>
      tpu.vector_store %arg10[%c0_24, %c0_25], %33 {strides = array<i32>} : memref<16x512xbf16, #tpu.memory_space<vmem>>, vector<16x512xbf16>,
    } else {
    }
    %c0 = arith.constant 0 : index
    %c0_1 = arith.constant 0 : index
    %3 = vector.load %arg10[%c0, %c0_1] : memref<16x512xbf16, #tpu.memory_space<vmem>>, vector<16x512xbf16>
    %c0_2 = arith.constant 0 : index
    %c0_3 = arith.constant 0 : index
    %4 = vector.load %arg7[%c0_2, %c0_3] : memref<512x768xbf16, #tpu.memory_space<vmem>>, vector<512x768xbf16>
    %cst = arith.constant dense<0.000000e+00> : vector<16x768xf32>
    %5 = tpu.matmul %3, %4, %cst {dimension_numbers = #tpu.dot_dimension_numbers<[1], [0], [0], [1], [0, 0, 1, 1], [], []>} : vector<16x512xbf16>, vector<512x768xbf16>, vector<16x768xf32> -> vector<16x768xf32>
    %c0_4 = arith.constant 0 : index
    %c0_5 = arith.constant 0 : index
    %6 = vector.load %arg8[%c0_4, %c0_5] : memref<1x768xf32, #tpu.memory_space<vmem>>, vector<1x768xf32>
    %7 = vector.broadcast %6 : vector<1x768xf32> to vector<16x768xf32>
    %8 = arith.addf %5, %7 : vector<16x768xf32>
    %9 = math.tanh %8 : vector<16x768xf32>
    %c0_6 = arith.constant 0 : index
    %c0_7 = arith.constant 0 : index
    %10 = vector.load %arg9[%c0_6, %c0_7] : memref<16x768xf32, #tpu.memory_space<vmem>>, vector<16x768xf32>
    tpu.vector_store %arg9[%c0_6, %c0_7], %9 {strides = array<i32>} : memref<16x768xf32, #tpu.memory_space<vmem>>, vector<16x768xf32>,
    return
  }
  func.func @transform_0(%arg0: i32, %arg1: i32) -> (i32, i32) {
    %c0_i32 = arith.constant 0 : i32
    %c0_i32_0 = arith.constant 0 : i32
    return %arg0, %c0_i32 : i32, i32
  }
  func.func @transform_1(%arg0: i32, %arg1: i32) -> (i32, i32) {
    %c0_i32 = arith.constant 0 : i32
    %c0_i32_0 = arith.constant 0 : i32
    %c0_i32_1 = arith.constant 0 : i32
    return %c0_i32, %c0_i32_0 : i32, i32
  }
  func.func @transform_2(%arg0: i32, %arg1: i32) -> (i32, i32) {
    %c0_i32 = arith.constant 0 : i32
    %c0_i32_0 = arith.constant 0 : i32
    %c0_i32_1 = arith.constant 0 : i32
    return %c0_i32, %c0_i32_0 : i32, i32
  }
  func.func @transform_3(%arg0: i32, %arg1: i32) -> (i32, i32) {
    %c0_i32 = arith.constant 0 : i32
    %c0_i32_0 = arith.constant 0 : i32
    %c0_i32_1 = arith.constant 0 : i32
    return %c0_i32, %c0_i32_0 : i32, i32
  }
  func.func @transform_4(%arg0: i32, %arg1: i32) -> (i32, i32) {
    %c0_i32 = arith.constant 0 : i32
    %c0_i32_0 = arith.constant 0 : i32
    %c0_i32_1 = arith.constant 0 : i32
    return %c0_i32, %c0_i32_0 : i32, i32
  }
  func.func @transform_5(%arg0: i32, %arg1: i32) -> (i32, i32) {
    %c0_i32 = arith.constant 0 : i32
    %c0_i32_0 = arith.constant 0 : i32
    return %c0_i32, %arg1 : i32, i32
  }
  func.func @transform_6(%arg0: i32, %arg1: i32) -> (i32, i32) {
    %c0_i32 = arith.constant 0 : i32
    %c0_i32_0 = arith.constant 0 : i32
    return %c0_i32, %arg1 : i32, i32
  }
  func.func @transform_7(%arg0: i32, %arg1: i32) -> (i32, i32) {
    %c0_i32 = arith.constant 0 : i32
    return %arg0, %arg1 : i32, i32
  }
}

</mosaic_0001>

<llo_original>
// kernel: tpu_custom_call.1
$region0: #{tpu_custom_call.1}
  #allocation0 [shape = 'u32[]', space=smem, size = 0x4, offset = 0x4, fixed_abs, tag = 'smem constant byte address 0x4 - core index']
  #allocation1 [shape = 'u32[144,128]{1,0:T(1,128)}', space=vmem, size = 0x12000, scoped, tag = 'internal scratch']
  #allocation2 [shape = 'bf16[16,512]{1,0:T(16,128)(2,1)}', space=vmem, size = 0x4000, scoped, tag = 'scratch operand']
  %s0 = inlined_call_operand.hbm [shape: bf16[16,32], index: 0, kind: input, shape index: {}]
  %s1 = inlined_call_operand.hbm [shape: bf16[32,256], index: 1, kind: input, shape index: {}]
  %s2 = inlined_call_operand.hbm [shape: f32[1,256], index: 2, kind: input, shape index: {}]
  %s3 = inlined_call_operand.hbm [shape: bf16[256,512], index: 3, kind: input, shape index: {}]
  %s4 = inlined_call_operand.vmem [shape: f32[1,512], index: 4, kind: input, shape index: {}]
  %s5 = inlined_call_operand.hbm [shape: bf16[512,768], index: 5, kind: input, shape index: {}]
  %s6 = inlined_call_operand.vmem [shape: f32[1,768], index: 6, kind: input, shape index: {}]
  %s7 = inlined_call_operand.hbm [shape: f32[16,768], index: 7, kind: output, shape index: {}]
  %s8 = sld [smem:[#allocation0]]
  $region62: #{tpu_custom_call.1} parent=0
    _
  %s10 = ssub.s32 1, %s8
  %s11 = scalar_select 0, %s10, %s8
  $region1: #{tpu_custom_call.1} parent=0
    #allocation3 [shape = 'u8[4096]{0}', space=vmem, size = 0x1000, scoped, tag = 'input window, operand 0, single buffered']
    #allocation4 [shape = 's32[1]{0}', space=sflag, size = 0x4, scoped, tag = 'scoped memory for tpu_custom_call.1']
    #allocation5 [shape = 's32[1]{0}', space=sflag, size = 0x4, scoped, tag = 'scoped memory for tpu_custom_call.1']
    #allocation6 [shape = 'u8[16384]{0}', space=vmem, size = 0x4000, scoped, tag = 'input window, operand 1, single buffered']
    #allocation7 [shape = 's32[1]{0}', space=sflag, size = 0x4, scoped, tag = 'scoped memory for tpu_custom_call.1']
    #allocation8 [shape = 'u8[1024]{0}', space=vmem, size = 0x400, scoped, tag = 'input window, operand 2, single buffered']
    #allocation9 [shape = 'u8[262144]{0}', space=vmem, size = 0x40000, scoped, tag = 'input window, operand 3, single buffered']
    #allocation10 [shape = 's32[1]{0}', space=sflag, size = 0x4, scoped, tag = 'scoped memory for tpu_custom_call.1']
    #allocation11 [shape = 'u8[786432]{0}', space=vmem, size = 0xc0000, scoped, tag = 'input window, operand 5, single buffered']
    #allocation12 [shape = 'u8[49152]{0}', space=vmem, size = 0xc000, scoped, tag = 'output window, operand 0, single buffered']
    %12 = vsyncpa [#allocation4], 0
    %13 = vsyncpa [#allocation7], 0
    %14 = vsyncpa [#allocation10], 0
    %15 = vsyncpa [#allocation5], 0
    // Predicated region
    $region2: #{tpu_custom_call.1} parent=1 // pred_check
      _
    $region3: #{tpu_custom_call.1} parent=1 // pred_check_branch
      %17 = sbr.rel (0) target = $region5
    $region4: #{tpu_custom_call.1} parent=1 // pred_region
      %s19 = ssub.s32 128, 128
      %20 = vsyncadd [#allocation4], %s19
      %s21 = sshll.u32 [#allocation3], 4
      %s22 = int_to_ptr.vmem [resolvable:$true] %s21
      %27 = dma.hbm_to_vmem [thread:$0]  %s0, 128, %s22, [#allocation4], 64, 64, 4
    $region5: #{tpu_custom_call.1} parent=1 // pred_fallthru
      _
    // Predicated region
    $region6: #{tpu_custom_call.1} parent=1 // pred_check
      _
    $region7: #{tpu_custom_call.1} parent=1 // pred_check_branch
      %29 = sbr.rel (0) target = $region9
    $region8: #{tpu_custom_call.1} parent=1 // pred_region
      %s31 = ssub.s32 512, 512
      %32 = vsyncadd [#allocation7], %s31
      %s33 = sshll.u32 [#allocation6], 4
      %s34 = int_to_ptr.vmem [resolvable:$true] %s33
      %39 = dma.hbm_to_vmem [thread:$0]  %s1, 512, %s34, [#allocation7], 128, 128, 8
    $region9: #{tpu_custom_call.1} parent=1 // pred_fallthru
      _
    // Predicated region
    $region10: #{tpu_custom_call.1} parent=1 // pred_check
      _
    $region11: #{tpu_custom_call.1} parent=1 // pred_check_branch
      %41 = sbr.rel (0) target = $region13
    $region12: #{tpu_custom_call.1} parent=1 // pred_region
      %s43 = ssub.s32 32, 32
      %44 = vsyncadd [#allocation7], %s43
      %s46 = sshll.u32 [#allocation8], 4
      %s47 = int_to_ptr.vmem [resolvable:$true] %s46
      %49 = dma.hbm_to_vmem [thread:$0]  %s2, 32, %s47, [#allocation7]
    $region13: #{tpu_custom_call.1} parent=1 // pred_fallthru
      _
    // Predicated region
    $region14: #{tpu_custom_call.1} parent=1 // pred_check
      _
    $region15: #{tpu_custom_call.1} parent=1 // pred_check_branch
      %51 = sbr.rel (0) target = $region17
    $region16: #{tpu_custom_call.1} parent=1 // pred_region
      %s53 = ssub.s32 8192, 8192
      %54 = vsyncadd [#allocation10], %s53
      %s55 = sshll.u32 [#allocation9], 4
      %s56 = int_to_ptr.vmem [resolvable:$true] %s55
      %61 = dma.hbm_to_vmem [thread:$0]  %s3, 8192, %s56, [#allocation10], 256, 256, 16
    $region17: #{tpu_custom_call.1} parent=1 // pred_fallthru
      _
    // Predicated region
    $region18: #{tpu_custom_call.1} parent=1 // pred_check
      _
    $region19: #{tpu_custom_call.1} parent=1 // pred_check_branch
      %63 = sbr.rel (0) target = $region21
    $region20: #{tpu_custom_call.1} parent=1 // pred_region
      _
    $region21: #{tpu_custom_call.1} parent=1 // pred_fallthru
      _
    // Predicated region
    $region22: #{tpu_custom_call.1} parent=1 // pred_check
      _
    $region23: #{tpu_custom_call.1} parent=1 // pred_check_branch
      %65 = sbr.rel (0) target = $region25
    $region24: #{tpu_custom_call.1} parent=1 // pred_region
      %s67 = ssub.s32 24576, 24576
      %68 = vsyncadd [#allocation10], %s67
      %s69 = sshll.u32 [#allocation11], 4
      %s70 = int_to_ptr.vmem [resolvable:$true] %s69
      %75 = dma.hbm_to_vmem [thread:$0]  %s5, 24576, %s70, [#allocation10], 384, 384, 24
    $region25: #{tpu_custom_call.1} parent=1 // pred_fallthru
      _
    // Predicated region
    $region26: #{tpu_custom_call.1} parent=1 // pred_check
      _
    $region27: #{tpu_custom_call.1} parent=1 // pred_check_branch
      %77 = sbr.rel (0) target = $region29
    $region28: #{tpu_custom_call.1} parent=1 // pred_region
      _
    $region29: #{tpu_custom_call.1} parent=1 // pred_fallthru
      _
    // Predicated region
    $region30: #{tpu_custom_call.1} parent=1 // pred_check
      _
    $region31: #{tpu_custom_call.1} parent=1 // pred_check_branch
      %79 = sbr.rel (0) target = $region33
    $region32: #{tpu_custom_call.1} parent=1 // pred_region
      %80 = dma.done [#allocation4], 128
    $region33: #{tpu_custom_call.1} parent=1 // pred_fallthru
      _
    // Predicated region
    $region34: #{tpu_custom_call.1} parent=1 // pred_check
      _
    $region35: #{tpu_custom_call.1} parent=1 // pred_check_branch
      %82 = sbr.rel (0) target = $region37
    $region36: #{tpu_custom_call.1} parent=1 // pred_region
      %83 = dma.done [#allocation7], 512
    $region37: #{tpu_custom_call.1} parent=1 // pred_fallthru
      _
    // Predicated region
    $region38: #{tpu_custom_call.1} parent=1 // pred_check
      _
    $region39: #{tpu_custom_call.1} parent=1 // pred_check_branch
      %85 = sbr.rel (0) target = $region41
    $region40: #{tpu_custom_call.1} parent=1 // pred_region
      %86 = dma.done [#allocation7], 32
    $region41: #{tpu_custom_call.1} parent=1 // pred_fallthru
      _
    // Predicated region
    $region42: #{tpu_custom_call.1} parent=1 // pred_check
      _
    $region43: #{tpu_custom_call.1} parent=1 // pred_check_branch
      %88 = sbr.rel (0) target = $region45
    $region44: #{tpu_custom_call.1} parent=1 // pred_region
      %89 = dma.done [#allocation10], 8192
    $region45: #{tpu_custom_call.1} parent=1 // pred_fallthru
      _
    // Predicated region
    $region46: #{tpu_custom_call.1} parent=1 // pred_check
      _
    $region47: #{tpu_custom_call.1} parent=1 // pred_check_branch
      %91 = sbr.rel (0) target = $region49
    $region48: #{tpu_custom_call.1} parent=1 // pred_region
      %92 = dma.done [#allocation10], 24576
    $region49: #{tpu_custom_call.1} parent=1 // pred_fallthru
      _
    %p94 = scmp.eq.s32.totalorder 0, 0
    // Predicated region
    $region50: #{tpu_custom_call.1} parent=1 // pred_check
      %p95 = pneg %p94
    $region51: #{tpu_custom_call.1} parent=1 // pred_check_branch
      %97 = sbr.rel (%p95) target = $region53
    $region52: #{tpu_custom_call.1} parent=1 // pred_region
      %v98 = vld [vmem:[#allocation3] sm:$0xf]
      %v99 = vld [vmem:[#allocation3 + $0x4] sm:$0xf]
      %v100 = vld [vmem:[#allocation6] sm:$0xff]
      %v101 = vld [vmem:[#allocation6 + $0x8] sm:$0xff]
      %v102 = vld [vmem:[#allocation6 + $0x10] sm:$0xff]
      %v103 = vld [vmem:[#allocation6 + $0x18] sm:$0xff]
      %v104 = vld [vmem:[#allocation8] sm:$0x3]
      %v106 = vlaneseq
      %v107 = vshrl.u32 %v106, 7
      %v108 = vsub.s32 0, %v107
      %v109 = vrot.slane %v104, %v108
      %v110 = vlaneseq
      %v111 = vshrl.u32 %v110, 7
      %v112 = vsub.s32 1, %v111
      %v113 = vrot.slane %v104, %v112
      %v118 = vunpack.c.l.b16 %v98
      %v119 = vunpack.c.l.b16 %v99
      %v120 = vpack.c.b16 %v119, %v118
      %v125 = vunpack.c.l.b16 %v100
      %v126 = vunpack.c.h.b16 %v100
      %v127 = vunpack.c.l.b16 %v101
      %v128 = vunpack.c.h.b16 %v101
      %v129 = vunpack.c.l.b16 %v102
      %v130 = vunpack.c.h.b16 %v102
      %v131 = vunpack.c.l.b16 %v103
      %v132 = vunpack.c.h.b16 %v103
      %v133 = vpack.c.b16 %v127, %v125
      %v134 = vpack.c.b16 %v128, %v126
      %v135 = vpack.c.b16 %v131, %v129
      %v136 = vpack.c.b16 %v132, %v130
      %vm141 = vcmask 261120
      %v143 = vsel %vm141, %v120, 0
      %145 = vmatprep.subr.bf16.mxu0 %v134
      %146 = vmatpush1.bf16.msra.mxu0 %v133
      %147 = vmatprep.subr.bf16.mxu0 %v136
      %148 = vmatpush1.bf16.msra.mxu0 %v135
      %149 = vmatprep.subr.bf16.mxu0 0
      %150 = vmatpush1.bf16.msra.mxu0 0
      %151 = vmatprep.subr.bf16.mxu0 0
      %152 = vmatpush1.bf16.msra.mxu0 0
      %153 = vmatprep.subr.bf16.mxu0 0
      %154 = vmatpush1.bf16.msra.mxu0 0
      %155 = vmatprep.subr.bf16.mxu0 0
      %156 = vmatpush1.bf16.msra.mxu0 0
      %157 = vmatprep.subr.bf16.mxu0 0
      %158 = vmatpush1.bf16.msra.mxu0 0
      %159 = vmatprep.subr.bf16.mxu0 0
      %160 = vmatpush1.bf16.msra.mxu0 0
      %161 = vmatprep.subr.bf16.mxu0 0
      %162 = vmatpush1.bf16.msra.mxu0 0
      %163 = vmatprep.subr.bf16.mxu0 0
      %164 = vmatpush1.bf16.msra.mxu0 0
      %165 = vmatprep.subr.bf16.mxu0 0
      %166 = vmatpush1.bf16.msra.mxu0 0
      %167 = vmatprep.subr.bf16.mxu0 0
      %168 = vmatpush1.bf16.msra.mxu0 0
      %169 = vmatprep.subr.bf16.mxu0 0
      %170 = vmatpush1.bf16.msra.mxu0 0
      %171 = vmatprep.subr.bf16.mxu0 0
      %172 = vmatpush1.bf16.msra.mxu0 0
      %173 = vmatprep.subr.bf16.mxu0 0
      %174 = vmatpush1.bf16.msra.mxu0 0
      %175 = vmatprep.subr.bf16.mxu0 0
      %176 = vmatpush1.bf16.msra.mxu0 0
      %177 = vmatprep.mubr.bf16.mxu0 0
      %178 = vmatmul.mubr.bf16.gmra.mrb[0].mxu0 %v143
      %v179 = vpop.f32.mrb[0].mxu0
      %v180 = vadd.f32 %v109, %v179
      %v181 = vpop.f32.mrb[0].mxu0
      %v182 = vadd.f32 %v113, %v181
      %v183 = vpop.f32.mrb[0].mxu0
      %v184 = vadd.f32 %v109, %v183
      %v185 = vpop.f32.mrb[0].mxu0
      %v186 = vadd.f32 %v113, %v185
      %187 = vdwg.mxu0
      %vm188 = vcmp.gt.f32.partialorder %v180, 0.0
      %vm189 = vcmp.gt.f32.partialorder %v182, 0.0
      %vm190 = vcmp.gt.f32.partialorder %v184, 0.0
      %vm191 = vcmp.gt.f32.partialorder %v186, 0.0
      %v192 = vmul.f32 %v180, 0.2
      %v193 = vmul.f32 %v182, 0.2
      %v194 = vmul.f32 %v184, 0.2
      %v195 = vmul.f32 %v186, 0.2
      %v196 = vsel %vm188, %v180, %v192
      %v197 = vsel %vm189, %v182, %v193
      %v198 = vsel %vm190, %v184, %v194
      %v199 = vsel %vm191, %v186, %v195
      %v200 = vpack.c.bf16 %v198, %v196
      %v201 = vpack.c.bf16 %v199, %v197
      %v202 = vld [vmem:[#allocation9] sm:$0xff]
      %v203 = vld [vmem:[#allocation9 + $0x8] sm:$0xff]
      %v204 = vld [vmem:[#allocation9 + $0x10] sm:$0xff]
      %v205 = vld [vmem:[#allocation9 + $0x18] sm:$0xff]
      %v206 = vld [vmem:[#allocation9 + $0x20] sm:$0xff]
      %v207 = vld [vmem:[#allocation9 + $0x28] sm:$0xff]
      %v208 = vld [vmem:[#allocation9 + $0x30] sm:$0xff]
      %v209 = vld [vmem:[#allocation9 + $0x38] sm:$0xff]
      %v210 = vld [vmem:[#allocation9 + $0x40] sm:$0xff]
      %v211 = vld [vmem:[#allocation9 + $0x48] sm:$0xff]
      %v212 = vld [vmem:[#allocation9 + $0x50] sm:$0xff]
      %v213 = vld [vmem:[#allocation9 + $0x58] sm:$0xff]
      %v214 = vld [vmem:[#allocation9 + $0x60] sm:$0xff]
      %v215 = vld [vmem:[#allocation9 + $0x68] sm:$0xff]
      %v216 = vld [vmem:[#allocation9 + $0x70] sm:$0xff]
      %v217 = vld [vmem:[#allocation9 + $0x78] sm:$0xff]
      %v218 = vld [vmem:[#allocation9 + $0x80] sm:$0xff]
      %v219 = vld [vmem:[#allocation9 + $0x88] sm:$0xff]
      %v220 = vld [vmem:[#allocation9 + $0x90] sm:$0xff]
      %v221 = vld [vmem:[#allocation9 + $0x98] sm:$0xff]
      %v222 = vld [vmem:[#allocation9 + $0xa0] sm:$0xff]
      %v223 = vld [vmem:[#allocation9 + $0xa8] sm:$0xff]
      %v224 = vld [vmem:[#allocation9 + $0xb0] sm:$0xff]
      %v225 = vld [vmem:[#allocation9 + $0xb8] sm:$0xff]
      %v226 = vld [vmem:[#allocation9 + $0xc0] sm:$0xff]
      %v227 = vld [vmem:[#allocation9 + $0xc8] sm:$0xff]
      %v228 = vld [vmem:[#allocation9 + $0xd0] sm:$0xff]
      %v229 = vld [vmem:[#allocation9 + $0xd8] sm:$0xff]
      %v230 = vld [vmem:[#allocation9 + $0xe0] sm:$0xff]
      %v231 = vld [vmem:[#allocation9 + $0xe8] sm:$0xff]
      %v232 = vld [vmem:[#allocation9 + $0xf0] sm:$0xff]
      %v233 = vld [vmem:[#allocation9 + $0xf8] sm:$0xff]
      %v234 = vld [vmem:[#allocation9 + $0x100] sm:$0xff]
      %v235 = vld [vmem:[#allocation9 + $0x108] sm:$0xff]
      %v236 = vld [vmem:[#allocation9 + $0x110] sm:$0xff]
      %v237 = vld [vmem:[#allocation9 + $0x118] sm:$0xff]
      %v238 = vld [vmem:[#allocation9 + $0x120] sm:$0xff]
      %v239 = vld [vmem:[#allocation9 + $0x128] sm:$0xff]
      %v240 = vld [vmem:[#allocation9 + $0x130] sm:$0xff]
      %v241 = vld [vmem:[#allocation9 + $0x138] sm:$0xff]
      %v242 = vld [vmem:[#allocation9 + $0x140] sm:$0xff]
      %v243 = vld [vmem:[#allocation9 + $0x148] sm:$0xff]
      %v244 = vld [vmem:[#allocation9 + $0x150] sm:$0xff]
      %v245 = vld [vmem:[#allocation9 + $0x158] sm:$0xff]
      %v246 = vld [vmem:[#allocation9 + $0x160] sm:$0xff]
      %v247 = vld [vmem:[#allocation9 + $0x168] sm:$0xff]
      %v248 = vld [vmem:[#allocation9 + $0x170] sm:$0xff]
      %v249 = vld [vmem:[#allocation9 + $0x178] sm:$0xff]
      %v250 = vld [vmem:[#allocation9 + $0x180] sm:$0xff]
      %v251 = vld [vmem:[#allocation9 + $0x188] sm:$0xff]
      %v252 = vld [vmem:[#allocation9 + $0x190] sm:$0xff]
      %v253 = vld [vmem:[#allocation9 + $0x198] sm:$0xff]
      %v254 = vld [vmem:[#allocation9 + $0x1a0] sm:$0xff]
      %v255 = vld [vmem:[#allocation9 + $0x1a8] sm:$0xff]
      %v256 = vld [vmem:[#allocation9 + $0x1b0] sm:$0xff]
      %v257 = vld [vmem:[#allocation9 + $0x1b8] sm:$0xff]
      %v258 = vld [vmem:[#allocation9 + $0x1c0] sm:$0xff]
      %v259 = vld [vmem:[#allocation9 + $0x1c8] sm:$0xff]
      %v260 = vld [vmem:[#allocation9 + $0x1d0] sm:$0xff]
      %v261 = vld [vmem:[#allocation9 + $0x1d8] sm:$0xff]
      %v262 = vld [vmem:[#allocation9 + $0x1e0] sm:$0xff]
      %v263 = vld [vmem:[#allocation9 + $0x1e8] sm:$0xff]
      %v264 = vld [vmem:[#allocation9 + $0x1f0] sm:$0xff]
      %v265 = vld [vmem:[#allocation9 + $0x1f8] sm:$0xff]
      %v266 = vld [vmem:[%s4] sm:$0xf]
      %v268 = vlaneseq
      %v269 = vshrl.u32 %v268, 7
      %v270 = vsub.s32 0, %v269
      %v271 = vrot.slane %v266, %v270
      %v272 = vlaneseq
      %v273 = vshrl.u32 %v272, 7
      %v274 = vsub.s32 1, %v273
      %v275 = vrot.slane %v266, %v274
      %v276 = vlaneseq
      %v277 = vshrl.u32 %v276, 7
      %v278 = vsub.s32 2, %v277
      %v279 = vrot.slane %v266, %v278
      %v280 = vlaneseq
      %v281 = vshrl.u32 %v280, 7
      %v282 = vsub.s32 3, %v281
      %v283 = vrot.slane %v266, %v282
      %v352 = vunpack.c.l.b16 %v202
      %v353 = vunpack.c.h.b16 %v202
      %v354 = vunpack.c.l.b16 %v203
      %v355 = vunpack.c.h.b16 %v203
      %v356 = vunpack.c.l.b16 %v204
      %v357 = vunpack.c.h.b16 %v204
      %v358 = vunpack.c.l.b16 %v205
      %v359 = vunpack.c.h.b16 %v205
      %v360 = vunpack.c.l.b16 %v206
      %v361 = vunpack.c.h.b16 %v206
      %v362 = vunpack.c.l.b16 %v207
      %v363 = vunpack.c.h.b16 %v207
      %v364 = vunpack.c.l.b16 %v208
      %v365 = vunpack.c.h.b16 %v208
      %v366 = vunpack.c.l.b16 %v209
      %v367 = vunpack.c.h.b16 %v209
      %v368 = vunpack.c.l.b16 %v210
      %v369 = vunpack.c.h.b16 %v210
      %v370 = vunpack.c.l.b16 %v211
      %v371 = vunpack.c.h.b16 %v211
      %v372 = vunpack.c.l.b16 %v212
      %v373 = vunpack.c.h.b16 %v212
      %v374 = vunpack.c.l.b16 %v213
      %v375 = vunpack.c.h.b16 %v213
      %v376 = vunpack.c.l.b16 %v214
      %v377 = vunpack.c.h.b16 %v214
      %v378 = vunpack.c.l.b16 %v215
      %v379 = vunpack.c.h.b16 %v215
      %v380 = vunpack.c.l.b16 %v216
      %v381 = vunpack.c.h.b16 %v216
      %v382 = vunpack.c.l.b16 %v217
      %v383 = vunpack.c.h.b16 %v217
      %v384 = vunpack.c.l.b16 %v218
      %v385 = vunpack.c.h.b16 %v218
      %v386 = vunpack.c.l.b16 %v219
      %v387 = vunpack.c.h.b16 %v219
      %v388 = vunpack.c.l.b16 %v220
      %v389 = vunpack.c.h.b16 %v220
      %v390 = vunpack.c.l.b16 %v221
      %v391 = vunpack.c.h.b16 %v221
      %v392 = vunpack.c.l.b16 %v222
      %v393 = vunpack.c.h.b16 %v222
      %v394 = vunpack.c.l.b16 %v223
      %v395 = vunpack.c.h.b16 %v223
      %v396 = vunpack.c.l.b16 %v224
      %v397 = vunpack.c.h.b16 %v224
      %v398 = vunpack.c.l.b16 %v225
      %v399 = vunpack.c.h.b16 %v225
      %v400 = vunpack.c.l.b16 %v226
      %v401 = vunpack.c.h.b16 %v226
      %v402 = vunpack.c.l.b16 %v227
      %v403 = vunpack.c.h.b16 %v227
      %v404 = vunpack.c.l.b16 %v228
      %v405 = vunpack.c.h.b16 %v228
      %v406 = vunpack.c.l.b16 %v229
      %v407 = vunpack.c.h.b16 %v229
      %v408 = vunpack.c.l.b16 %v230
      %v409 = vunpack.c.h.b16 %v230
      %v410 = vunpack.c.l.b16 %v231
      %v411 = vunpack.c.h.b16 %v231
      %v412 = vunpack.c.l.b16 %v232
      %v413 = vunpack.c.h.b16 %v232
      %v414 = vunpack.c.l.b16 %v233
      %v415 = vunpack.c.h.b16 %v233
      %v416 = vunpack.c.l.b16 %v234
      %v417 = vunpack.c.h.b16 %v234
      %v418 = vunpack.c.l.b16 %v235
      %v419 = vunpack.c.h.b16 %v235
      %v420 = vunpack.c.l.b16 %v236
      %v421 = vunpack.c.h.b16 %v236
      %v422 = vunpack.c.l.b16 %v237
      %v423 = vunpack.c.h.b16 %v237
      %v424 = vunpack.c.l.b16 %v238
      %v425 = vunpack.c.h.b16 %v238
      %v426 = vunpack.c.l.b16 %v239
      %v427 = vunpack.c.h.b16 %v239
      %v428 = vunpack.c.l.b16 %v240
      %v429 = vunpack.c.h.b16 %v240
      %v430 = vunpack.c.l.b16 %v241
      %v431 = vunpack.c.h.b16 %v241
      %v432 = vunpack.c.l.b16 %v242
      %v433 = vunpack.c.h.b16 %v242
      %v434 = vunpack.c.l.b16 %v243
      %v435 = vunpack.c.h.b16 %v243
      %v436 = vunpack.c.l.b16 %v244
      %v437 = vunpack.c.h.b16 %v244
      %v438 = vunpack.c.l.b16 %v245
      %v439 = vunpack.c.h.b16 %v245
      %v440 = vunpack.c.l.b16 %v246
      %v441 = vunpack.c.h.b16 %v246
      %v442 = vunpack.c.l.b16 %v247
      %v443 = vunpack.c.h.b16 %v247
      %v444 = vunpack.c.l.b16 %v248
      %v445 = vunpack.c.h.b16 %v248
      %v446 = vunpack.c.l.b16 %v249
      %v447 = vunpack.c.h.b16 %v249
      %v448 = vunpack.c.l.b16 %v250
      %v449 = vunpack.c.h.b16 %v250
      %v450 = vunpack.c.l.b16 %v251
      %v451 = vunpack.c.h.b16 %v251
      %v452 = vunpack.c.l.b16 %v252
      %v453 = vunpack.c.h.b16 %v252
      %v454 = vunpack.c.l.b16 %v253
      %v455 = vunpack.c.h.b16 %v253
      %v456 = vunpack.c.l.b16 %v254
      %v457 = vunpack.c.h.b16 %v254
      %v458 = vunpack.c.l.b16 %v255
      %v459 = vunpack.c.h.b16 %v255
      %v460 = vunpack.c.l.b16 %v256
      %v461 = vunpack.c.h.b16 %v256
      %v462 = vunpack.c.l.b16 %v257
      %v463 = vunpack.c.h.b16 %v257
      %v464 = vunpack.c.l.b16 %v258
      %v465 = vunpack.c.h.b16 %v258
      %v466 = vunpack.c.l.b16 %v259
      %v467 = vunpack.c.h.b16 %v259
      %v468 = vunpack.c.l.b16 %v260
      %v469 = vunpack.c.h.b16 %v260
      %v470 = vunpack.c.l.b16 %v261
      %v471 = vunpack.c.h.b16 %v261
      %v472 = vunpack.c.l.b16 %v262
      %v473 = vunpack.c.h.b16 %v262
      %v474 = vunpack.c.l.b16 %v263
      %v475 = vunpack.c.h.b16 %v263
      %v476 = vunpack.c.l.b16 %v264
      %v477 = vunpack.c.h.b16 %v264
      %v478 = vunpack.c.l.b16 %v265
      %v479 = vunpack.c.h.b16 %v265
      %v480 = vpack.c.b16 %v356, %v352
      %v481 = vpack.c.b16 %v357, %v353
      %v482 = vpack.c.b16 %v358, %v354
      %v483 = vpack.c.b16 %v359, %v355
      %v484 = vpack.c.b16 %v364, %v360
      %v485 = vpack.c.b16 %v365, %v361
      %v486 = vpack.c.b16 %v366, %v362
      %v487 = vpack.c.b16 %v367, %v363
      %v488 = vpack.c.b16 %v372, %v368
      %v489 = vpack.c.b16 %v373, %v369
      %v490 = vpack.c.b16 %v374, %v370
      %v491 = vpack.c.b16 %v375, %v371
      %v492 = vpack.c.b16 %v380, %v376
      %v493 = vpack.c.b16 %v381, %v377
      %v494 = vpack.c.b16 %v382, %v378
      %v495 = vpack.c.b16 %v383, %v379
      %v496 = vpack.c.b16 %v388, %v384
      %v497 = vpack.c.b16 %v389, %v385
      %v498 = vpack.c.b16 %v390, %v386
      %v499 = vpack.c.b16 %v391, %v387
      %v500 = vpack.c.b16 %v396, %v392
      %v501 = vpack.c.b16 %v397, %v393
      %v502 = vpack.c.b16 %v398, %v394
      %v503 = vpack.c.b16 %v399, %v395
      %v504 = vpack.c.b16 %v404, %v400
      %v505 = vpack.c.b16 %v405, %v401
      %v506 = vpack.c.b16 %v406, %v402
      %v507 = vpack.c.b16 %v407, %v403
      %v508 = vpack.c.b16 %v412, %v408
      %v509 = vpack.c.b16 %v413, %v409
      %v510 = vpack.c.b16 %v414, %v410
      %v511 = vpack.c.b16 %v415, %v411
      %v512 = vpack.c.b16 %v420, %v416
      %v513 = vpack.c.b16 %v421, %v417
      %v514 = vpack.c.b16 %v422, %v418
      %v515 = vpack.c.b16 %v423, %v419
      %v516 = vpack.c.b16 %v428, %v424
      %v517 = vpack.c.b16 %v429, %v425
      %v518 = vpack.c.b16 %v430, %v426
      %v519 = vpack.c.b16 %v431, %v427
      %v520 = vpack.c.b16 %v436, %v432
      %v521 = vpack.c.b16 %v437, %v433
      %v522 = vpack.c.b16 %v438, %v434
      %v523 = vpack.c.b16 %v439, %v435
      %v524 = vpack.c.b16 %v444, %v440
      %v525 = vpack.c.b16 %v445, %v441
      %v526 = vpack.c.b16 %v446, %v442
      %v527 = vpack.c.b16 %v447, %v443
      %v528 = vpack.c.b16 %v452, %v448
      %v529 = vpack.c.b16 %v453, %v449
      %v530 = vpack.c.b16 %v454, %v450
      %v531 = vpack.c.b16 %v455, %v451
      %v532 = vpack.c.b16 %v460, %v456
      %v533 = vpack.c.b16 %v461, %v457
      %v534 = vpack.c.b16 %v462, %v458
      %v535 = vpack.c.b16 %v463, %v459
      %v536 = vpack.c.b16 %v468, %v464
      %v537 = vpack.c.b16 %v469, %v465
      %v538 = vpack.c.b16 %v470, %v466
      %v539 = vpack.c.b16 %v471, %v467
      %v540 = vpack.c.b16 %v476, %v472
      %v541 = vpack.c.b16 %v477, %v473
      %v542 = vpack.c.b16 %v478, %v474
      %v543 = vpack.c.b16 %v479, %v475
      %608 = vmatprep.subr.bf16.mxu0 %v481
      %609 = vmatpush1.bf16.msra.mxu0 %v480
      %610 = vmatprep.subr.bf16.mxu0 %v485
      %611 = vmatpush1.bf16.msra.mxu0 %v484
      %612 = vmatprep.subr.bf16.mxu0 %v489
      %613 = vmatpush1.bf16.msra.mxu0 %v488
      %614 = vmatprep.subr.bf16.mxu0 %v493
      %615 = vmatpush1.bf16.msra.mxu0 %v492
      %616 = vmatprep.subr.bf16.mxu0 %v497
      %617 = vmatpush1.bf16.msra.mxu0 %v496
      %618 = vmatprep.subr.bf16.mxu0 %v501
      %619 = vmatpush1.bf16.msra.mxu0 %v500
      %620 = vmatprep.subr.bf16.mxu0 %v505
      %621 = vmatpush1.bf16.msra.mxu0 %v504
      %622 = vmatprep.subr.bf16.mxu0 %v509
      %623 = vmatpush1.bf16.msra.mxu0 %v508
      %624 = vmatprep.subr.bf16.mxu0 %v513
      %625 = vmatpush1.bf16.msra.mxu0 %v512
      %626 = vmatprep.subr.bf16.mxu0 %v517
      %627 = vmatpush1.bf16.msra.mxu0 %v516
      %628 = vmatprep.subr.bf16.mxu0 %v521
      %629 = vmatpush1.bf16.msra.mxu0 %v520
      %630 = vmatprep.subr.bf16.mxu0 %v525
      %631 = vmatpush1.bf16.msra.mxu0 %v524
      %632 = vmatprep.subr.bf16.mxu0 %v529
      %633 = vmatpush1.bf16.msra.mxu0 %v528
      %634 = vmatprep.subr.bf16.mxu0 %v533
      %635 = vmatpush1.bf16.msra.mxu0 %v532
      %636 = vmatprep.subr.bf16.mxu0 %v537
      %637 = vmatpush1.bf16.msra.mxu0 %v536
      %638 = vmatprep.subr.bf16.mxu0 %v541
      %639 = vmatpush1.bf16.msra.mxu0 %v540
      %640 = vmatprep.mubr.bf16.mxu0 %v201
      %641 = vmatmul.mubr.bf16.gmra.mrb[0].mxu0 %v200
      %v642 = vpop.f32.mrb[0].mxu0
      %v643 = vadd.f32 %v271, %v642
      %v644 = vpop.f32.mrb[0].mxu0
      %v645 = vadd.f32 %v275, %v644
      %v646 = vpop.f32.mrb[0].mxu0
      %v647 = vadd.f32 %v271, %v646
      %v648 = vpop.f32.mrb[0].mxu0
      %v649 = vadd.f32 %v275, %v648
      %650 = vdwg.mxu0
      %651 = vmatprep.subr.bf16.mxu0 %v483
      %652 = vmatpush1.bf16.msra.mxu0 %v482
      %653 = vmatprep.subr.bf16.mxu0 %v487
      %654 = vmatpush1.bf16.msra.mxu0 %v486
      %655 = vmatprep.subr.bf16.mxu0 %v491
      %656 = vmatpush1.bf16.msra.mxu0 %v490
      %657 = vmatprep.subr.bf16.mxu0 %v495
      %658 = vmatpush1.bf16.msra.mxu0 %v494
      %659 = vmatprep.subr.bf16.mxu0 %v499
      %660 = vmatpush1.bf16.msra.mxu0 %v498
      %661 = vmatprep.subr.bf16.mxu0 %v503
      %662 = vmatpush1.bf16.msra.mxu0 %v502
      %663 = vmatprep.subr.bf16.mxu0 %v507
      %664 = vmatpush1.bf16.msra.mxu0 %v506
      %665 = vmatprep.subr.bf16.mxu0 %v511
      %666 = vmatpush1.bf16.msra.mxu0 %v510
      %667 = vmatprep.subr.bf16.mxu0 %v515
      %668 = vmatpush1.bf16.msra.mxu0 %v514
      %669 = vmatprep.subr.bf16.mxu0 %v519
      %670 = vmatpush1.bf16.msra.mxu0 %v518
      %671 = vmatprep.subr.bf16.mxu0 %v523
      %672 = vmatpush1.bf16.msra.mxu0 %v522
      %673 = vmatprep.subr.bf16.mxu0 %v527
      %674 = vmatpush1.bf16.msra.mxu0 %v526
      %675 = vmatprep.subr.bf16.mxu0 %v531
      %676 = vmatpush1.bf16.msra.mxu0 %v530
      %677 = vmatprep.subr.bf16.mxu0 %v535
      %678 = vmatpush1.bf16.msra.mxu0 %v534
      %679 = vmatprep.subr.bf16.mxu0 %v539
      %680 = vmatpush1.bf16.msra.mxu0 %v538
      %681 = vmatprep.subr.bf16.mxu0 %v543
      %682 = vmatpush1.bf16.msra.mxu0 %v542
      %683 = vmatprep.mubr.bf16.mxu0 %v201
      %684 = vmatmul.mubr.bf16.gmra.mrb[0].mxu0 %v200
      %v685 = vpop.f32.mrb[0].mxu0
      %v686 = vadd.f32 %v279, %v685
      %v687 = vpop.f32.mrb[0].mxu0
      %v688 = vadd.f32 %v283, %v687
      %v689 = vpop.f32.mrb[0].mxu0
      %v690 = vadd.f32 %v279, %v689
      %v691 = vpop.f32.mrb[0].mxu0
      %v692 = vadd.f32 %v283, %v691
      %693 = vdwg.mxu0
      %vm694 = vcmp.gt.f32.partialorder %v643, 0.0
      %vm695 = vcmp.gt.f32.partialorder %v645, 0.0
      %vm696 = vcmp.gt.f32.partialorder %v686, 0.0
      %vm697 = vcmp.gt.f32.partialorder %v688, 0.0
      %vm698 = vcmp.gt.f32.partialorder %v647, 0.0
      %vm699 = vcmp.gt.f32.partialorder %v649, 0.0
      %vm700 = vcmp.gt.f32.partialorder %v690, 0.0
      %vm701 = vcmp.gt.f32.partialorder %v692, 0.0
      %v702 = vmul.f32 %v643, 0.2
      %v703 = vmul.f32 %v645, 0.2
      %v704 = vmul.f32 %v686, 0.2
      %v705 = vmul.f32 %v688, 0.2
      %v706 = vmul.f32 %v647, 0.2
      %v707 = vmul.f32 %v649, 0.2
      %v708 = vmul.f32 %v690, 0.2
      %v709 = vmul.f32 %v692, 0.2
      %v710 = vsel %vm694, %v643, %v702
      %v711 = vsel %vm695, %v645, %v703
      %v712 = vsel %vm696, %v686, %v704
      %v713 = vsel %vm697, %v688, %v705
      %v714 = vsel %vm698, %v647, %v706
      %v715 = vsel %vm699, %v649, %v707
      %v716 = vsel %vm700, %v690, %v708
      %v717 = vsel %vm701, %v692, %v709
      %v718 = vpack.c.bf16 %v714, %v710
      %v719 = vpack.c.bf16 %v715, %v711
      %v720 = vpack.c.bf16 %v716, %v712
      %v721 = vpack.c.bf16 %v717, %v713
      %722 = vst [vmem:[#allocation2] sm:$0xff] %v718
      %723 = vst [vmem:[#allocation2 + $0x8] sm:$0xff] %v719
      %724 = vst [vmem:[#allocation2 + $0x10] sm:$0xff] %v720
      %725 = vst [vmem:[#allocation2 + $0x18] sm:$0xff] %v721
    $region53: #{tpu_custom_call.1} parent=1 // pred_fallthru
      _
    %v726 = vld [vmem:[#allocation2] sm:$0xff]
    %v727 = vld [vmem:[#allocation2 + $0x8] sm:$0xff]
    %v728 = vld [vmem:[#allocation2 + $0x10] sm:$0xff]
    %v729 = vld [vmem:[#allocation2 + $0x18] sm:$0xff]
    %v730 = vld [vmem:[#allocation11] sm:$0xff]
    %v731 = vld [vmem:[#allocation11 + $0x8] sm:$0xff]
    %v732 = vld [vmem:[#allocation11 + $0x10] sm:$0xff]
    %v733 = vld [vmem:[#allocation11 + $0x18] sm:$0xff]
    %v734 = vld [vmem:[#allocation11 + $0x20] sm:$0xff]
    %v735 = vld [vmem:[#allocation11 + $0x28] sm:$0xff]
    %v736 = vld [vmem:[#allocation11 + $0x30] sm:$0xff]
    %v737 = vld [vmem:[#allocation11 + $0x38] sm:$0xff]
    %v738 = vld [vmem:[#allocation11 + $0x40] sm:$0xff]
    %v739 = vld [vmem:[#allocation11 + $0x48] sm:$0xff]
    %v740 = vld [vmem:[#allocation11 + $0x50] sm:$0xff]
    %v741 = vld [vmem:[#allocation11 + $0x58] sm:$0xff]
    %v742 = vld [vmem:[#allocation11 + $0x60] sm:$0xff]
    %v743 = vld [vmem:[#allocation11 + $0x68] sm:$0xff]
    %v744 = vld [vmem:[#allocation11 + $0x70] sm:$0xff]
    %v745 = vld [vmem:[#allocation11 + $0x78] sm:$0xff]
    %v746 = vld [vmem:[#allocation11 + $0x80] sm:$0xff]
    %v747 = vld [vmem:[#allocation11 + $0x88] sm:$0xff]
    %v748 = vld [vmem:[#allocation11 + $0x90] sm:$0xff]
    %v749 = vld [vmem:[#allocation11 + $0x98] sm:$0xff]
    %v750 = vld [vmem:[#allocation11 + $0xa0] sm:$0xff]
    %v751 = vld [vmem:[#allocation11 + $0xa8] sm:$0xff]
    %v752 = vld [vmem:[#allocation11 + $0xb0] sm:$0xff]
    %v753 = vld [vmem:[#allocation11 + $0xb8] sm:$0xff]
    %v754 = vld [vmem:[#allocation11 + $0xc0] sm:$0xff]
    %v755 = vld [vmem:[#allocation11 + $0xc8] sm:$0xff]
    %v756 = vld [vmem:[#allocation11 + $0xd0] sm:$0xff]
    %v757 = vld [vmem:[#allocation11 + $0xd8] sm:$0xff]
    %v758 = vld [vmem:[#allocation11 + $0xe0] sm:$0xff]
    %v759 = vld [vmem:[#allocation11 + $0xe8] sm:$0xff]
    %v760 = vld [vmem:[#allocation11 + $0xf0] sm:$0xff]
    %v761 = vld [vmem:[#allocation11 + $0xf8] sm:$0xff]
    %v762 = vld [vmem:[#allocation11 + $0x100] sm:$0xff]
    %v763 = vld [vmem:[#allocation11 + $0x108] sm:$0xff]
    %v764 = vld [vmem:[#allocation11 + $0x110] sm:$0xff]
    %v765 = vld [vmem:[#allocation11 + $0x118] sm:$0xff]
    %v766 = vld [vmem:[#allocation11 + $0x120] sm:$0xff]
    %v767 = vld [vmem:[#allocation11 + $0x128] sm:$0xff]
    %v768 = vld [vmem:[#allocation11 + $0x130] sm:$0xff]
    %v769 = vld [vmem:[#allocation11 + $0x138] sm:$0xff]
    %v770 = vld [vmem:[#allocation11 + $0x140] sm:$0xff]
    %v771 = vld [vmem:[#allocation11 + $0x148] sm:$0xff]
    %v772 = vld [vmem:[#allocation11 + $0x150] sm:$0xff]
    %v773 = vld [vmem:[#allocation11 + $0x158] sm:$0xff]
    %v774 = vld [vmem:[#allocation11 + $0x160] sm:$0xff]
    %v775 = vld [vmem:[#allocation11 + $0x168] sm:$0xff]
    %v776 = vld [vmem:[#allocation11 + $0x170] sm:$0xff]
    %v777 = vld [vmem:[#allocation11 + $0x178] sm:$0xff]
    %v778 = vld [vmem:[#allocation11 + $0x180] sm:$0xff]
    %v779 = vld [vmem:[#allocation11 + $0x188] sm:$0xff]
    %v780 = vld [vmem:[#allocation11 + $0x190] sm:$0xff]
    %v781 = vld [vmem:[#allocation11 + $0x198] sm:$0xff]
    %v782 = vld [vmem:[#allocation11 + $0x1a0] sm:$0xff]
    %v783 = vld [vmem:[#allocation11 + $0x1a8] sm:$0xff]
    %v784 = vld [vmem:[#allocation11 + $0x1b0] sm:$0xff]
    %v785 = vld [vmem:[#allocation11 + $0x1b8] sm:$0xff]
    %v786 = vld [vmem:[#allocation11 + $0x1c0] sm:$0xff]
    %v787 = vld [vmem:[#allocation11 + $0x1c8] sm:$0xff]
    %v788 = vld [vmem:[#allocation11 + $0x1d0] sm:$0xff]
    %v789 = vld [vmem:[#allocation11 + $0x1d8] sm:$0xff]
    %v790 = vld [vmem:[#allocation11 + $0x1e0] sm:$0xff]
    %v791 = vld [vmem:[#allocation11 + $0x1e8] sm:$0xff]
    %v792 = vld [vmem:[#allocation11 + $0x1f0] sm:$0xff]
    %v793 = vld [vmem:[#allocation11 + $0x1f8] sm:$0xff]
    %v794 = vld [vmem:[#allocation11 + $0x200] sm:$0xff]
    %v795 = vld [vmem:[#allocation11 + $0x208] sm:$0xff]
    %v796 = vld [vmem:[#allocation11 + $0x210] sm:$0xff]
    %v797 = vld [vmem:[#allocation11 + $0x218] sm:$0xff]
    %v798 = vld [vmem:[#allocation11 + $0x220] sm:$0xff]
    %v799 = vld [vmem:[#allocation11 + $0x228] sm:$0xff]
    %v800 = vld [vmem:[#allocation11 + $0x230] sm:$0xff]
    %v801 = vld [vmem:[#allocation11 + $0x238] sm:$0xff]
    %v802 = vld [vmem:[#allocation11 + $0x240] sm:$0xff]
    %v803 = vld [vmem:[#allocation11 + $0x248] sm:$0xff]
    %v804 = vld [vmem:[#allocation11 + $0x250] sm:$0xff]
    %v805 = vld [vmem:[#allocation11 + $0x258] sm:$0xff]
    %v806 = vld [vmem:[#allocation11 + $0x260] sm:$0xff]
    %v807 = vld [vmem:[#allocation11 + $0x268] sm:$0xff]
    %v808 = vld [vmem:[#allocation11 + $0x270] sm:$0xff]
    %v809 = vld [vmem:[#allocation11 + $0x278] sm:$0xff]
    %v810 = vld [vmem:[#allocation11 + $0x280] sm:$0xff]
    %v811 = vld [vmem:[#allocation11 + $0x288] sm:$0xff]
    %v812 = vld [vmem:[#allocation11 + $0x290] sm:$0xff]
    %v813 = vld [vmem:[#allocation11 + $0x298] sm:$0xff]
    %v814 = vld [vmem:[#allocation11 + $0x2a0] sm:$0xff]
    %v815 = vld [vmem:[#allocation11 + $0x2a8] sm:$0xff]
    %v816 = vld [vmem:[#allocation11 + $0x2b0] sm:$0xff]
    %v817 = vld [vmem:[#allocation11 + $0x2b8] sm:$0xff]
    %v818 = vld [vmem:[#allocation11 + $0x2c0] sm:$0xff]
    %v819 = vld [vmem:[#allocation11 + $0x2c8] sm:$0xff]
    %v820 = vld [vmem:[#allocation11 + $0x2d0] sm:$0xff]
    %v821 = vld [vmem:[#allocation11 + $0x2d8] sm:$0xff]
    %v822 = vld [vmem:[#allocation11 + $0x2e0] sm:$0xff]
    %v823 = vld [vmem:[#allocation11 + $0x2e8] sm:$0xff]
    %v824 = vld [vmem:[#allocation11 + $0x2f0] sm:$0xff]
    %v825 = vld [vmem:[#allocation11 + $0x2f8] sm:$0xff]
    %v826 = vld [vmem:[#allocation11 + $0x300] sm:$0xff]
    %v827 = vld [vmem:[#allocation11 + $0x308] sm:$0xff]
    %v828 = vld [vmem:[#allocation11 + $0x310] sm:$0xff]
    %v829 = vld [vmem:[#allocation11 + $0x318] sm:$0xff]
    %v830 = vld [vmem:[#allocation11 + $0x320] sm:$0xff]
    %v831 = vld [vmem:[#allocation11 + $0x328] sm:$0xff]
    %v832 = vld [vmem:[#allocation11 + $0x330] sm:$0xff]
    %v833 = vld [vmem:[#allocation11 + $0x338] sm:$0xff]
    %v834 = vld [vmem:[#allocation11 + $0x340] sm:$0xff]
    %v835 = vld [vmem:[#allocation11 + $0x348] sm:$0xff]
    %v836 = vld [vmem:[#allocation11 + $0x350] sm:$0xff]
    %v837 = vld [vmem:[#allocation11 + $0x358] sm:$0xff]
    %v838 = vld [vmem:[#allocation11 + $0x360] sm:$0xff]
    %v839 = vld [vmem:[#allocation11 + $0x368] sm:$0xff]
    %v840 = vld [vmem:[#allocation11 + $0x370] sm:$0xff]
    %v841 = vld [vmem:[#allocation11 + $0x378] sm:$0xff]
    %v842 = vld [vmem:[#allocation11 + $0x380] sm:$0xff]
    %v843 = vld [vmem:[#allocation11 + $0x388] sm:$0xff]
    %v844 = vld [vmem:[#allocation11 + $0x390] sm:$0xff]
    %v845 = vld [vmem:[#allocation11 + $0x398] sm:$0xff]
    %v846 = vld [vmem:[#allocation11 + $0x3a0] sm:$0xff]
    %v847 = vld [vmem:[#allocation11 + $0x3a8] sm:$0xff]
    %v848 = vld [vmem:[#allocation11 + $0x3b0] sm:$0xff]
    %v849 = vld [vmem:[#allocation11 + $0x3b8] sm:$0xff]
    %v850 = vld [vmem:[#allocation11 + $0x3c0] sm:$0xff]
    %v851 = vld [vmem:[#allocation11 + $0x3c8] sm:$0xff]
    %v852 = vld [vmem:[#allocation11 + $0x3d0] sm:$0xff]
    %v853 = vld [vmem:[#allocation11 + $0x3d8] sm:$0xff]
    %v854 = vld [vmem:[#allocation11 + $0x3e0] sm:$0xff]
    %v855 = vld [vmem:[#allocation11 + $0x3e8] sm:$0xff]
    %v856 = vld [vmem:[#allocation11 + $0x3f0] sm:$0xff]
    %v857 = vld [vmem:[#allocation11 + $0x3f8] sm:$0xff]
    %v858 = vld [vmem:[#allocation11 + $0x400] sm:$0xff]
    %v859 = vld [vmem:[#allocation11 + $0x408] sm:$0xff]
    %v860 = vld [vmem:[#allocation11 + $0x410] sm:$0xff]
    %v861 = vld [vmem:[#allocation11 + $0x418] sm:$0xff]
    %v862 = vld [vmem:[#allocation11 + $0x420] sm:$0xff]
    %v863 = vld [vmem:[#allocation11 + $0x428] sm:$0xff]
    %v864 = vld [vmem:[#allocation11 + $0x430] sm:$0xff]
    %v865 = vld [vmem:[#allocation11 + $0x438] sm:$0xff]
    %v866 = vld [vmem:[#allocation11 + $0x440] sm:$0xff]
    %v867 = vld [vmem:[#allocation11 + $0x448] sm:$0xff]
    %v868 = vld [vmem:[#allocation11 + $0x450] sm:$0xff]
    %v869 = vld [vmem:[#allocation11 + $0x458] sm:$0xff]
    %v870 = vld [vmem:[#allocation11 + $0x460] sm:$0xff]
    %v871 = vld [vmem:[#allocation11 + $0x468] sm:$0xff]
    %v872 = vld [vmem:[#allocation11 + $0x470] sm:$0xff]
    %v873 = vld [vmem:[#allocation11 + $0x478] sm:$0xff]
    %v874 = vld [vmem:[#allocation11 + $0x480] sm:$0xff]
    %v875 = vld [vmem:[#allocation11 + $0x488] sm:$0xff]
    %v876 = vld [vmem:[#allocation11 + $0x490] sm:$0xff]
    %v877 = vld [vmem:[#allocation11 + $0x498] sm:$0xff]
    %v878 = vld [vmem:[#allocation11 + $0x4a0] sm:$0xff]
    %v879 = vld [vmem:[#allocation11 + $0x4a8] sm:$0xff]
    %v880 = vld [vmem:[#allocation11 + $0x4b0] sm:$0xff]
    %v881 = vld [vmem:[#allocation11 + $0x4b8] sm:$0xff]
    %v882 = vld [vmem:[#allocation11 + $0x4c0] sm:$0xff]
    %v883 = vld [vmem:[#allocation11 + $0x4c8] sm:$0xff]
    %v884 = vld [vmem:[#allocation11 + $0x4d0] sm:$0xff]
    %v885 = vld [vmem:[#allocation11 + $0x4d8] sm:$0xff]
    %v886 = vld [vmem:[#allocation11 + $0x4e0] sm:$0xff]
    %v887 = vld [vmem:[#allocation11 + $0x4e8] sm:$0xff]
    %v888 = vld [vmem:[#allocation11 + $0x4f0] sm:$0xff]
    %v889 = vld [vmem:[#allocation11 + $0x4f8] sm:$0xff]
    %v890 = vld [vmem:[#allocation11 + $0x500] sm:$0xff]
    %v891 = vld [vmem:[#allocation11 + $0x508] sm:$0xff]
    %v892 = vld [vmem:[#allocation11 + $0x510] sm:$0xff]
    %v893 = vld [vmem:[#allocation11 + $0x518] sm:$0xff]
    %v894 = vld [vmem:[#allocation11 + $0x520] sm:$0xff]
    %v895 = vld [vmem:[#allocation11 + $0x528] sm:$0xff]
    %v896 = vld [vmem:[#allocation11 + $0x530] sm:$0xff]
    %v897 = vld [vmem:[#allocation11 + $0x538] sm:$0xff]
    %v898 = vld [vmem:[#allocation11 + $0x540] sm:$0xff]
    %v899 = vld [vmem:[#allocation11 + $0x548] sm:$0xff]
    %v900 = vld [vmem:[#allocation11 + $0x550] sm:$0xff]
    %v901 = vld [vmem:[#allocation11 + $0x558] sm:$0xff]
    %v902 = vld [vmem:[#allocation11 + $0x560] sm:$0xff]
    %v903 = vld [vmem:[#allocation11 + $0x568] sm:$0xff]
    %v904 = vld [vmem:[#allocation11 + $0x570] sm:$0xff]
    %v905 = vld [vmem:[#allocation11 + $0x578] sm:$0xff]
    %v906 = vld [vmem:[#allocation11 + $0x580] sm:$0xff]
    %v907 = vld [vmem:[#allocation11 + $0x588] sm:$0xff]
    %v908 = vld [vmem:[#allocation11 + $0x590] sm:$0xff]
    %v909 = vld [vmem:[#allocation11 + $0x598] sm:$0xff]
    %v910 = vld [vmem:[#allocation11 + $0x5a0] sm:$0xff]
    %v911 = vld [vmem:[#allocation11 + $0x5a8] sm:$0xff]
    %v912 = vld [vmem:[#allocation11 + $0x5b0] sm:$0xff]
    %v913 = vld [vmem:[#allocation11 + $0x5b8] sm:$0xff]
    %v914 = vld [vmem:[#allocation11 + $0x5c0] sm:$0xff]
    %v915 = vld [vmem:[#allocation11 + $0x5c8] sm:$0xff]
    %v916 = vld [vmem:[#allocation11 + $0x5d0] sm:$0xff]
    %v917 = vld [vmem:[#allocation11 + $0x5d8] sm:$0xff]
    %v918 = vld [vmem:[#allocation11 + $0x5e0] sm:$0xff]
    %v919 = vld [vmem:[#allocation11 + $0x5e8] sm:$0xff]
    %v920 = vld [vmem:[#allocation11 + $0x5f0] sm:$0xff]
    %v921 = vld [vmem:[#allocation11 + $0x5f8] sm:$0xff]
    %v922 = vld [vmem:[%s6] sm:$0x3f]
    %v924 = vlaneseq
    %v925 = vshrl.u32 %v924, 7
    %v926 = vsub.s32 0, %v925
    %v927 = vrot.slane %v922, %v926
    %v928 = vlaneseq
    %v929 = vshrl.u32 %v928, 7
    %v930 = vsub.s32 1, %v929
    %v931 = vrot.slane %v922, %v930
    %v932 = vlaneseq
    %v933 = vshrl.u32 %v932, 7
    %v934 = vsub.s32 2, %v933
    %v935 = vrot.slane %v922, %v934
    %v936 = vlaneseq
    %v937 = vshrl.u32 %v936, 7
    %v938 = vsub.s32 3, %v937
    %v939 = vrot.slane %v922, %v938
    %v940 = vlaneseq
    %v941 = vshrl.u32 %v940, 7
    %v942 = vsub.s32 4, %v941
    %v943 = vrot.slane %v922, %v942
    %v944 = vlaneseq
    %v945 = vshrl.u32 %v944, 7
    %v946 = vsub.s32 5, %v945
    %v947 = vrot.slane %v922, %v946
    %v1146 = vunpack.c.l.b16 %v730
    %v1147 = vunpack.c.h.b16 %v730
    %v1148 = vunpack.c.l.b16 %v731
    %v1149 = vunpack.c.h.b16 %v731
    %v1150 = vunpack.c.l.b16 %v732
    %v1151 = vunpack.c.h.b16 %v732
    %v1152 = vunpack.c.l.b16 %v733
    %v1153 = vunpack.c.h.b16 %v733
    %v1154 = vunpack.c.l.b16 %v734
    %v1155 = vunpack.c.h.b16 %v734
    %v1156 = vunpack.c.l.b16 %v735
    %v1157 = vunpack.c.h.b16 %v735
    %v1158 = vunpack.c.l.b16 %v736
    %v1159 = vunpack.c.h.b16 %v736
    %v1160 = vunpack.c.l.b16 %v737
    %v1161 = vunpack.c.h.b16 %v737
    %v1162 = vunpack.c.l.b16 %v738
    %v1163 = vunpack.c.h.b16 %v738
    %v1164 = vunpack.c.l.b16 %v739
    %v1165 = vunpack.c.h.b16 %v739
    %v1166 = vunpack.c.l.b16 %v740
    %v1167 = vunpack.c.h.b16 %v740
    %v1168 = vunpack.c.l.b16 %v741
    %v1169 = vunpack.c.h.b16 %v741
    %v1170 = vunpack.c.l.b16 %v742
    %v1171 = vunpack.c.h.b16 %v742
    %v1172 = vunpack.c.l.b16 %v743
    %v1173 = vunpack.c.h.b16 %v743
    %v1174 = vunpack.c.l.b16 %v744
    %v1175 = vunpack.c.h.b16 %v744
    %v1176 = vunpack.c.l.b16 %v745
    %v1177 = vunpack.c.h.b16 %v745
    %v1178 = vunpack.c.l.b16 %v746
    %v1179 = vunpack.c.h.b16 %v746
    %v1180 = vunpack.c.l.b16 %v747
    %v1181 = vunpack.c.h.b16 %v747
    %v1182 = vunpack.c.l.b16 %v748
    %v1183 = vunpack.c.h.b16 %v748
    %v1184 = vunpack.c.l.b16 %v749
    %v1185 = vunpack.c.h.b16 %v749
    %v1186 = vunpack.c.l.b16 %v750
    %v1187 = vunpack.c.h.b16 %v750
    %v1188 = vunpack.c.l.b16 %v751
    %v1189 = vunpack.c.h.b16 %v751
    %v1190 = vunpack.c.l.b16 %v752
    %v1191 = vunpack.c.h.b16 %v752
    %v1192 = vunpack.c.l.b16 %v753
    %v1193 = vunpack.c.h.b16 %v753
    %v1194 = vunpack.c.l.b16 %v754
    %v1195 = vunpack.c.h.b16 %v754
    %v1196 = vunpack.c.l.b16 %v755
    %v1197 = vunpack.c.h.b16 %v755
    %v1198 = vunpack.c.l.b16 %v756
    %v1199 = vunpack.c.h.b16 %v756
    %v1200 = vunpack.c.l.b16 %v757
    %v1201 = vunpack.c.h.b16 %v757
    %v1202 = vunpack.c.l.b16 %v758
    %v1203 = vunpack.c.h.b16 %v758
    %v1204 = vunpack.c.l.b16 %v759
    %v1205 = vunpack.c.h.b16 %v759
    %v1206 = vunpack.c.l.b16 %v760
    %v1207 = vunpack.c.h.b16 %v760
    %v1208 = vunpack.c.l.b16 %v761
    %v1209 = vunpack.c.h.b16 %v761
    %v1210 = vunpack.c.l.b16 %v762
    %v1211 = vunpack.c.h.b16 %v762
    %v1212 = vunpack.c.l.b16 %v763
    %v1213 = vunpack.c.h.b16 %v763
    %v1214 = vunpack.c.l.b16 %v764
    %v1215 = vunpack.c.h.b16 %v764
    %v1216 = vunpack.c.l.b16 %v765
    %v1217 = vunpack.c.h.b16 %v765
    %v1218 = vunpack.c.l.b16 %v766
    %v1219 = vunpack.c.h.b16 %v766
    %v1220 = vunpack.c.l.b16 %v767
    %v1221 = vunpack.c.h.b16 %v767
    %v1222 = vunpack.c.l.b16 %v768
    %v1223 = vunpack.c.h.b16 %v768
    %v1224 = vunpack.c.l.b16 %v769
    %v1225 = vunpack.c.h.b16 %v769
    %v1226 = vunpack.c.l.b16 %v770
    %v1227 = vunpack.c.h.b16 %v770
    %v1228 = vunpack.c.l.b16 %v771
    %v1229 = vunpack.c.h.b16 %v771
    %v1230 = vunpack.c.l.b16 %v772
    %v1231 = vunpack.c.h.b16 %v772
    %v1232 = vunpack.c.l.b16 %v773
    %v1233 = vunpack.c.h.b16 %v773
    %v1234 = vunpack.c.l.b16 %v774
    %v1235 = vunpack.c.h.b16 %v774
    %v1236 = vunpack.c.l.b16 %v775
    %v1237 = vunpack.c.h.b16 %v775
    %v1238 = vunpack.c.l.b16 %v776
    %v1239 = vunpack.c.h.b16 %v776
    %v1240 = vunpack.c.l.b16 %v777
    %v1241 = vunpack.c.h.b16 %v777
    %v1242 = vunpack.c.l.b16 %v778
    %v1243 = vunpack.c.h.b16 %v778
    %v1244 = vunpack.c.l.b16 %v779
    %v1245 = vunpack.c.h.b16 %v779
    %v1246 = vunpack.c.l.b16 %v780
    %v1247 = vunpack.c.h.b16 %v780
    %v1248 = vunpack.c.l.b16 %v781
    %v1249 = vunpack.c.h.b16 %v781
    %v1250 = vunpack.c.l.b16 %v782
    %v1251 = vunpack.c.h.b16 %v782
    %v1252 = vunpack.c.l.b16 %v783
    %v1253 = vunpack.c.h.b16 %v783
    %v1254 = vunpack.c.l.b16 %v784
    %v1255 = vunpack.c.h.b16 %v784
    %v1256 = vunpack.c.l.b16 %v785
    %v1257 = vunpack.c.h.b16 %v785
    %v1258 = vunpack.c.l.b16 %v786
    %v1259 = vunpack.c.h.b16 %v786
    %v1260 = vunpack.c.l.b16 %v787
    %v1261 = vunpack.c.h.b16 %v787
    %v1262 = vunpack.c.l.b16 %v788
    %v1263 = vunpack.c.h.b16 %v788
    %v1264 = vunpack.c.l.b16 %v789
    %v1265 = vunpack.c.h.b16 %v789
    %v1266 = vunpack.c.l.b16 %v790
    %v1267 = vunpack.c.h.b16 %v790
    %v1268 = vunpack.c.l.b16 %v791
    %v1269 = vunpack.c.h.b16 %v791
    %v1270 = vunpack.c.l.b16 %v792
    %v1271 = vunpack.c.h.b16 %v792
    %v1272 = vunpack.c.l.b16 %v793
    %v1273 = vunpack.c.h.b16 %v793
    %v1274 = vunpack.c.l.b16 %v794
    %v1275 = vunpack.c.h.b16 %v794
    %v1276 = vunpack.c.l.b16 %v795
    %v1277 = vunpack.c.h.b16 %v795
    %v1278 = vunpack.c.l.b16 %v796
    %v1279 = vunpack.c.h.b16 %v796
    %v1280 = vunpack.c.l.b16 %v797
    %v1281 = vunpack.c.h.b16 %v797
    %v1282 = vunpack.c.l.b16 %v798
    %v1283 = vunpack.c.h.b16 %v798
    %v1284 = vunpack.c.l.b16 %v799
    %v1285 = vunpack.c.h.b16 %v799
    %v1286 = vunpack.c.l.b16 %v800
    %v1287 = vunpack.c.h.b16 %v800
    %v1288 = vunpack.c.l.b16 %v801
    %v1289 = vunpack.c.h.b16 %v801
    %v1290 = vunpack.c.l.b16 %v802
    %v1291 = vunpack.c.h.b16 %v802
    %v1292 = vunpack.c.l.b16 %v803
    %v1293 = vunpack.c.h.b16 %v803
    %v1294 = vunpack.c.l.b16 %v804
    %v1295 = vunpack.c.h.b16 %v804
    %v1296 = vunpack.c.l.b16 %v805
    %v1297 = vunpack.c.h.b16 %v805
    %v1298 = vunpack.c.l.b16 %v806
    %v1299 = vunpack.c.h.b16 %v806
    %v1300 = vunpack.c.l.b16 %v807
    %v1301 = vunpack.c.h.b16 %v807
    %v1302 = vunpack.c.l.b16 %v808
    %v1303 = vunpack.c.h.b16 %v808
    %v1304 = vunpack.c.l.b16 %v809
    %v1305 = vunpack.c.h.b16 %v809
    %v1306 = vunpack.c.l.b16 %v810
    %v1307 = vunpack.c.h.b16 %v810
    %v1308 = vunpack.c.l.b16 %v811
    %v1309 = vunpack.c.h.b16 %v811
    %v1310 = vunpack.c.l.b16 %v812
    %v1311 = vunpack.c.h.b16 %v812
    %v1312 = vunpack.c.l.b16 %v813
    %v1313 = vunpack.c.h.b16 %v813
    %v1314 = vunpack.c.l.b16 %v814
    %v1315 = vunpack.c.h.b16 %v814
    %v1316 = vunpack.c.l.b16 %v815
    %v1317 = vunpack.c.h.b16 %v815
    %v1318 = vunpack.c.l.b16 %v816
    %v1319 = vunpack.c.h.b16 %v816
    %v1320 = vunpack.c.l.b16 %v817
    %v1321 = vunpack.c.h.b16 %v817
    %v1322 = vunpack.c.l.b16 %v818
    %v1323 = vunpack.c.h.b16 %v818
    %v1324 = vunpack.c.l.b16 %v819
    %v1325 = vunpack.c.h.b16 %v819
    %v1326 = vunpack.c.l.b16 %v820
    %v1327 = vunpack.c.h.b16 %v820
    %v1328 = vunpack.c.l.b16 %v821
    %v1329 = vunpack.c.h.b16 %v821
    %v1330 = vunpack.c.l.b16 %v822
    %v1331 = vunpack.c.h.b16 %v822
    %v1332 = vunpack.c.l.b16 %v823
    %v1333 = vunpack.c.h.b16 %v823
    %v1334 = vunpack.c.l.b16 %v824
    %v1335 = vunpack.c.h.b16 %v824
    %v1336 = vunpack.c.l.b16 %v825
    %v1337 = vunpack.c.h.b16 %v825
    %v1338 = vunpack.c.l.b16 %v826
    %v1339 = vunpack.c.h.b16 %v826
    %v1340 = vunpack.c.l.b16 %v827
    %v1341 = vunpack.c.h.b16 %v827
    %v1342 = vunpack.c.l.b16 %v828
    %v1343 = vunpack.c.h.b16 %v828
    %v1344 = vunpack.c.l.b16 %v829
    %v1345 = vunpack.c.h.b16 %v829
    %v1346 = vunpack.c.l.b16 %v830
    %v1347 = vunpack.c.h.b16 %v830
    %v1348 = vunpack.c.l.b16 %v831
    %v1349 = vunpack.c.h.b16 %v831
    %v1350 = vunpack.c.l.b16 %v832
    %v1351 = vunpack.c.h.b16 %v832
    %v1352 = vunpack.c.l.b16 %v833
    %v1353 = vunpack.c.h.b16 %v833
    %v1354 = vunpack.c.l.b16 %v834
    %v1355 = vunpack.c.h.b16 %v834
    %v1356 = vunpack.c.l.b16 %v835
    %v1357 = vunpack.c.h.b16 %v835
    %v1358 = vunpack.c.l.b16 %v836
    %v1359 = vunpack.c.h.b16 %v836
    %v1360 = vunpack.c.l.b16 %v837
    %v1361 = vunpack.c.h.b16 %v837
    %v1362 = vunpack.c.l.b16 %v838
    %v1363 = vunpack.c.h.b16 %v838
    %v1364 = vunpack.c.l.b16 %v839
    %v1365 = vunpack.c.h.b16 %v839
    %v1366 = vunpack.c.l.b16 %v840
    %v1367 = vunpack.c.h.b16 %v840
    %v1368 = vunpack.c.l.b16 %v841
    %v1369 = vunpack.c.h.b16 %v841
    %v1370 = vunpack.c.l.b16 %v842
    %v1371 = vunpack.c.h.b16 %v842
    %v1372 = vunpack.c.l.b16 %v843
    %v1373 = vunpack.c.h.b16 %v843
    %v1374 = vunpack.c.l.b16 %v844
    %v1375 = vunpack.c.h.b16 %v844
    %v1376 = vunpack.c.l.b16 %v845
    %v1377 = vunpack.c.h.b16 %v845
    %v1378 = vunpack.c.l.b16 %v846
    %v1379 = vunpack.c.h.b16 %v846
    %v1380 = vunpack.c.l.b16 %v847
    %v1381 = vunpack.c.h.b16 %v847
    %v1382 = vunpack.c.l.b16 %v848
    %v1383 = vunpack.c.h.b16 %v848
    %v1384 = vunpack.c.l.b16 %v849
    %v1385 = vunpack.c.h.b16 %v849
    %v1386 = vunpack.c.l.b16 %v850
    %v1387 = vunpack.c.h.b16 %v850
    %v1388 = vunpack.c.l.b16 %v851
    %v1389 = vunpack.c.h.b16 %v851
    %v1390 = vunpack.c.l.b16 %v852
    %v1391 = vunpack.c.h.b16 %v852
    %v1392 = vunpack.c.l.b16 %v853
    %v1393 = vunpack.c.h.b16 %v853
    %v1394 = vunpack.c.l.b16 %v854
    %v1395 = vunpack.c.h.b16 %v854
    %v1396 = vunpack.c.l.b16 %v855
    %v1397 = vunpack.c.h.b16 %v855
    %v1398 = vunpack.c.l.b16 %v856
    %v1399 = vunpack.c.h.b16 %v856
    %v1400 = vunpack.c.l.b16 %v857
    %v1401 = vunpack.c.h.b16 %v857
    %v1402 = vunpack.c.l.b16 %v858
    %v1403 = vunpack.c.h.b16 %v858
    %v1404 = vunpack.c.l.b16 %v859
    %v1405 = vunpack.c.h.b16 %v859
    %v1406 = vunpack.c.l.b16 %v860
    %v1407 = vunpack.c.h.b16 %v860
    %v1408 = vunpack.c.l.b16 %v861
    %v1409 = vunpack.c.h.b16 %v861
    %v1410 = vunpack.c.l.b16 %v862
    %v1411 = vunpack.c.h.b16 %v862
    %v1412 = vunpack.c.l.b16 %v863
    %v1413 = vunpack.c.h.b16 %v863
    %v1414 = vunpack.c.l.b16 %v864
    %v1415 = vunpack.c.h.b16 %v864
    %v1416 = vunpack.c.l.b16 %v865
    %v1417 = vunpack.c.h.b16 %v865
    %v1418 = vunpack.c.l.b16 %v866
    %v1419 = vunpack.c.h.b16 %v866
    %v1420 = vunpack.c.l.b16 %v867
    %v1421 = vunpack.c.h.b16 %v867
    %v1422 = vunpack.c.l.b16 %v868
    %v1423 = vunpack.c.h.b16 %v868
    %v1424 = vunpack.c.l.b16 %v869
    %v1425 = vunpack.c.h.b16 %v869
    %v1426 = vunpack.c.l.b16 %v870
    %v1427 = vunpack.c.h.b16 %v870
    %v1428 = vunpack.c.l.b16 %v871
    %v1429 = vunpack.c.h.b16 %v871
    %v1430 = vunpack.c.l.b16 %v872
    %v1431 = vunpack.c.h.b16 %v872
    %v1432 = vunpack.c.l.b16 %v873
    %v1433 = vunpack.c.h.b16 %v873
    %v1434 = vunpack.c.l.b16 %v874
    %v1435 = vunpack.c.h.b16 %v874
    %v1436 = vunpack.c.l.b16 %v875
    %v1437 = vunpack.c.h.b16 %v875
    %v1438 = vunpack.c.l.b16 %v876
    %v1439 = vunpack.c.h.b16 %v876
    %v1440 = vunpack.c.l.b16 %v877
    %v1441 = vunpack.c.h.b16 %v877
    %v1442 = vunpack.c.l.b16 %v878
    %v1443 = vunpack.c.h.b16 %v878
    %v1444 = vunpack.c.l.b16 %v879
    %v1445 = vunpack.c.h.b16 %v879
    %v1446 = vunpack.c.l.b16 %v880
    %v1447 = vunpack.c.h.b16 %v880
    %v1448 = vunpack.c.l.b16 %v881
    %v1449 = vunpack.c.h.b16 %v881
    %v1450 = vunpack.c.l.b16 %v882
    %v1451 = vunpack.c.h.b16 %v882
    %v1452 = vunpack.c.l.b16 %v883
    %v1453 = vunpack.c.h.b16 %v883
    %v1454 = vunpack.c.l.b16 %v884
    %v1455 = vunpack.c.h.b16 %v884
    %v1456 = vunpack.c.l.b16 %v885
    %v1457 = vunpack.c.h.b16 %v885
    %v1458 = vunpack.c.l.b16 %v886
    %v1459 = vunpack.c.h.b16 %v886
    %v1460 = vunpack.c.l.b16 %v887
    %v1461 = vunpack.c.h.b16 %v887
    %v1462 = vunpack.c.l.b16 %v888
    %v1463 = vunpack.c.h.b16 %v888
    %v1464 = vunpack.c.l.b16 %v889
    %v1465 = vunpack.c.h.b16 %v889
    %v1466 = vunpack.c.l.b16 %v890
    %v1467 = vunpack.c.h.b16 %v890
    %v1468 = vunpack.c.l.b16 %v891
    %v1469 = vunpack.c.h.b16 %v891
    %v1470 = vunpack.c.l.b16 %v892
    %v1471 = vunpack.c.h.b16 %v892
    %v1472 = vunpack.c.l.b16 %v893
    %v1473 = vunpack.c.h.b16 %v893
    %v1474 = vunpack.c.l.b16 %v894
    %v1475 = vunpack.c.h.b16 %v894
    %v1476 = vunpack.c.l.b16 %v895
    %v1477 = vunpack.c.h.b16 %v895
    %v1478 = vunpack.c.l.b16 %v896
    %v1479 = vunpack.c.h.b16 %v896
    %v1480 = vunpack.c.l.b16 %v897
    %v1481 = vunpack.c.h.b16 %v897
    %v1482 = vunpack.c.l.b16 %v898
    %v1483 = vunpack.c.h.b16 %v898
    %v1484 = vunpack.c.l.b16 %v899
    %v1485 = vunpack.c.h.b16 %v899
    %v1486 = vunpack.c.l.b16 %v900
    %v1487 = vunpack.c.h.b16 %v900
    %v1488 = vunpack.c.l.b16 %v901
    %v1489 = vunpack.c.h.b16 %v901
    %v1490 = vunpack.c.l.b16 %v902
    %v1491 = vunpack.c.h.b16 %v902
    %v1492 = vunpack.c.l.b16 %v903
    %v1493 = vunpack.c.h.b16 %v903
    %v1494 = vunpack.c.l.b16 %v904
    %v1495 = vunpack.c.h.b16 %v904
    %v1496 = vunpack.c.l.b16 %v905
    %v1497 = vunpack.c.h.b16 %v905
    %v1498 = vunpack.c.l.b16 %v906
    %v1499 = vunpack.c.h.b16 %v906
    %v1500 = vunpack.c.l.b16 %v907
    %v1501 = vunpack.c.h.b16 %v907
    %v1502 = vunpack.c.l.b16 %v908
    %v1503 = vunpack.c.h.b16 %v908
    %v1504 = vunpack.c.l.b16 %v909
    %v1505 = vunpack.c.h.b16 %v909
    %v1506 = vunpack.c.l.b16 %v910
    %v1507 = vunpack.c.h.b16 %v910
    %v1508 = vunpack.c.l.b16 %v911
    %v1509 = vunpack.c.h.b16 %v911
    %v1510 = vunpack.c.l.b16 %v912
    %v1511 = vunpack.c.h.b16 %v912
    %v1512 = vunpack.c.l.b16 %v913
    %v1513 = vunpack.c.h.b16 %v913
    %v1514 = vunpack.c.l.b16 %v914
    %v1515 = vunpack.c.h.b16 %v914
    %v1516 = vunpack.c.l.b16 %v915
    %v1517 = vunpack.c.h.b16 %v915
    %v1518 = vunpack.c.l.b16 %v916
    %v1519 = vunpack.c.h.b16 %v916
    %v1520 = vunpack.c.l.b16 %v917
    %v1521 = vunpack.c.h.b16 %v917
    %v1522 = vunpack.c.l.b16 %v918
    %v1523 = vunpack.c.h.b16 %v918
    %v1524 = vunpack.c.l.b16 %v919
    %v1525 = vunpack.c.h.b16 %v919
    %v1526 = vunpack.c.l.b16 %v920
    %v1527 = vunpack.c.h.b16 %v920
    %v1528 = vunpack.c.l.b16 %v921
    %v1529 = vunpack.c.h.b16 %v921
    %v1530 = vpack.c.b16 %v1152, %v1146
    %v1531 = vpack.c.b16 %v1153, %v1147
    %v1532 = vpack.c.b16 %v1154, %v1148
    %v1533 = vpack.c.b16 %v1155, %v1149
    %v1534 = vpack.c.b16 %v1156, %v1150
    %v1535 = vpack.c.b16 %v1157, %v1151
    %v1536 = vpack.c.b16 %v1164, %v1158
    %v1537 = vpack.c.b16 %v1165, %v1159
    %v1538 = vpack.c.b16 %v1166, %v1160
    %v1539 = vpack.c.b16 %v1167, %v1161
    %v1540 = vpack.c.b16 %v1168, %v1162
    %v1541 = vpack.c.b16 %v1169, %v1163
    %v1542 = vpack.c.b16 %v1176, %v1170
    %v1543 = vpack.c.b16 %v1177, %v1171
    %v1544 = vpack.c.b16 %v1178, %v1172
    %v1545 = vpack.c.b16 %v1179, %v1173
    %v1546 = vpack.c.b16 %v1180, %v1174
    %v1547 = vpack.c.b16 %v1181, %v1175
    %v1548 = vpack.c.b16 %v1188, %v1182
    %v1549 = vpack.c.b16 %v1189, %v1183
    %v1550 = vpack.c.b16 %v1190, %v1184
    %v1551 = vpack.c.b16 %v1191, %v1185
    %v1552 = vpack.c.b16 %v1192, %v1186
    %v1553 = vpack.c.b16 %v1193, %v1187
    %v1554 = vpack.c.b16 %v1200, %v1194
    %v1555 = vpack.c.b16 %v1201, %v1195
    %v1556 = vpack.c.b16 %v1202, %v1196
    %v1557 = vpack.c.b16 %v1203, %v1197
    %v1558 = vpack.c.b16 %v1204, %v1198
    %v1559 = vpack.c.b16 %v1205, %v1199
    %v1560 = vpack.c.b16 %v1212, %v1206
    %v1561 = vpack.c.b16 %v1213, %v1207
    %v1562 = vpack.c.b16 %v1214, %v1208
    %v1563 = vpack.c.b16 %v1215, %v1209
    %v1564 = vpack.c.b16 %v1216, %v1210
    %v1565 = vpack.c.b16 %v1217, %v1211
    %v1566 = vpack.c.b16 %v1224, %v1218
    %v1567 = vpack.c.b16 %v1225, %v1219
    %v1568 = vpack.c.b16 %v1226, %v1220
    %v1569 = vpack.c.b16 %v1227, %v1221
    %v1570 = vpack.c.b16 %v1228, %v1222
    %v1571 = vpack.c.b16 %v1229, %v1223
    %v1572 = vpack.c.b16 %v1236, %v1230
    %v1573 = vpack.c.b16 %v1237, %v1231
    %v1574 = vpack.c.b16 %v1238, %v1232
    %v1575 = vpack.c.b16 %v1239, %v1233
    %v1576 = vpack.c.b16 %v1240, %v1234
    %v1577 = vpack.c.b16 %v1241, %v1235
    %v1578 = vpack.c.b16 %v1248, %v1242
    %v1579 = vpack.c.b16 %v1249, %v1243
    %v1580 = vpack.c.b16 %v1250, %v1244
    %v1581 = vpack.c.b16 %v1251, %v1245
    %v1582 = vpack.c.b16 %v1252, %v1246
    %v1583 = vpack.c.b16 %v1253, %v1247
    %v1584 = vpack.c.b16 %v1260, %v1254
    %v1585 = vpack.c.b16 %v1261, %v1255
    %v1586 = vpack.c.b16 %v1262, %v1256
    %v1587 = vpack.c.b16 %v1263, %v1257
    %v1588 = vpack.c.b16 %v1264, %v1258
    %v1589 = vpack.c.b16 %v1265, %v1259
    %v1590 = vpack.c.b16 %v1272, %v1266
    %v1591 = vpack.c.b16 %v1273, %v1267
    %v1592 = vpack.c.b16 %v1274, %v1268
    %v1593 = vpack.c.b16 %v1275, %v1269
    %v1594 = vpack.c.b16 %v1276, %v1270
    %v1595 = vpack.c.b16 %v1277, %v1271
    %v1596 = vpack.c.b16 %v1284, %v1278
    %v1597 = vpack.c.b16 %v1285, %v1279
    %v1598 = vpack.c.b16 %v1286, %v1280
    %v1599 = vpack.c.b16 %v1287, %v1281
    %v1600 = vpack.c.b16 %v1288, %v1282
    %v1601 = vpack.c.b16 %v1289, %v1283
    %v1602 = vpack.c.b16 %v1296, %v1290
    %v1603 = vpack.c.b16 %v1297, %v1291
    %v1604 = vpack.c.b16 %v1298, %v1292
    %v1605 = vpack.c.b16 %v1299, %v1293
    %v1606 = vpack.c.b16 %v1300, %v1294
    %v1607 = vpack.c.b16 %v1301, %v1295
    %v1608 = vpack.c.b16 %v1308, %v1302
    %v1609 = vpack.c.b16 %v1309, %v1303
    %v1610 = vpack.c.b16 %v1310, %v1304
    %v1611 = vpack.c.b16 %v1311, %v1305
    %v1612 = vpack.c.b16 %v1312, %v1306
    %v1613 = vpack.c.b16 %v1313, %v1307
    %v1614 = vpack.c.b16 %v1320, %v1314
    %v1615 = vpack.c.b16 %v1321, %v1315
    %v1616 = vpack.c.b16 %v1322, %v1316
    %v1617 = vpack.c.b16 %v1323, %v1317
    %v1618 = vpack.c.b16 %v1324, %v1318
    %v1619 = vpack.c.b16 %v1325, %v1319
    %v1620 = vpack.c.b16 %v1332, %v1326
    %v1621 = vpack.c.b16 %v1333, %v1327
    %v1622 = vpack.c.b16 %v1334, %v1328
    %v1623 = vpack.c.b16 %v1335, %v1329
    %v1624 = vpack.c.b16 %v1336, %v1330
    %v1625 = vpack.c.b16 %v1337, %v1331
    %v1626 = vpack.c.b16 %v1344, %v1338
    %v1627 = vpack.c.b16 %v1345, %v1339
    %v1628 = vpack.c.b16 %v1346, %v1340
    %v1629 = vpack.c.b16 %v1347, %v1341
    %v1630 = vpack.c.b16 %v1348, %v1342
    %v1631 = vpack.c.b16 %v1349, %v1343
    %v1632 = vpack.c.b16 %v1356, %v1350
    %v1633 = vpack.c.b16 %v1357, %v1351
    %v1634 = vpack.c.b16 %v1358, %v1352
    %v1635 = vpack.c.b16 %v1359, %v1353
    %v1636 = vpack.c.b16 %v1360, %v1354
    %v1637 = vpack.c.b16 %v1361, %v1355
    %v1638 = vpack.c.b16 %v1368, %v1362
    %v1639 = vpack.c.b16 %v1369, %v1363
    %v1640 = vpack.c.b16 %v1370, %v1364
    %v1641 = vpack.c.b16 %v1371, %v1365
    %v1642 = vpack.c.b16 %v1372, %v1366
    %v1643 = vpack.c.b16 %v1373, %v1367
    %v1644 = vpack.c.b16 %v1380, %v1374
    %v1645 = vpack.c.b16 %v1381, %v1375
    %v1646 = vpack.c.b16 %v1382, %v1376
    %v1647 = vpack.c.b16 %v1383, %v1377
    %v1648 = vpack.c.b16 %v1384, %v1378
    %v1649 = vpack.c.b16 %v1385, %v1379
    %v1650 = vpack.c.b16 %v1392, %v1386
    %v1651 = vpack.c.b16 %v1393, %v1387
    %v1652 = vpack.c.b16 %v1394, %v1388
    %v1653 = vpack.c.b16 %v1395, %v1389
    %v1654 = vpack.c.b16 %v1396, %v1390
    %v1655 = vpack.c.b16 %v1397, %v1391
    %v1656 = vpack.c.b16 %v1404, %v1398
    %v1657 = vpack.c.b16 %v1405, %v1399
    %v1658 = vpack.c.b16 %v1406, %v1400
    %v1659 = vpack.c.b16 %v1407, %v1401
    %v1660 = vpack.c.b16 %v1408, %v1402
    %v1661 = vpack.c.b16 %v1409, %v1403
    %v1662 = vpack.c.b16 %v1416, %v1410
    %v1663 = vpack.c.b16 %v1417, %v1411
    %v1664 = vpack.c.b16 %v1418, %v1412
    %v1665 = vpack.c.b16 %v1419, %v1413
    %v1666 = vpack.c.b16 %v1420, %v1414
    %v1667 = vpack.c.b16 %v1421, %v1415
    %v1668 = vpack.c.b16 %v1428, %v1422
    %v1669 = vpack.c.b16 %v1429, %v1423
    %v1670 = vpack.c.b16 %v1430, %v1424
    %v1671 = vpack.c.b16 %v1431, %v1425
    %v1672 = vpack.c.b16 %v1432, %v1426
    %v1673 = vpack.c.b16 %v1433, %v1427
    %v1674 = vpack.c.b16 %v1440, %v1434
    %v1675 = vpack.c.b16 %v1441, %v1435
    %v1676 = vpack.c.b16 %v1442, %v1436
    %v1677 = vpack.c.b16 %v1443, %v1437
    %v1678 = vpack.c.b16 %v1444, %v1438
    %v1679 = vpack.c.b16 %v1445, %v1439
    %v1680 = vpack.c.b16 %v1452, %v1446
    %v1681 = vpack.c.b16 %v1453, %v1447
    %v1682 = vpack.c.b16 %v1454, %v1448
    %v1683 = vpack.c.b16 %v1455, %v1449
    %v1684 = vpack.c.b16 %v1456, %v1450
    %v1685 = vpack.c.b16 %v1457, %v1451
    %v1686 = vpack.c.b16 %v1464, %v1458
    %v1687 = vpack.c.b16 %v1465, %v1459
    %v1688 = vpack.c.b16 %v1466, %v1460
    %v1689 = vpack.c.b16 %v1467, %v1461
    %v1690 = vpack.c.b16 %v1468, %v1462
    %v1691 = vpack.c.b16 %v1469, %v1463
    %v1692 = vpack.c.b16 %v1476, %v1470
    %v1693 = vpack.c.b16 %v1477, %v1471
    %v1694 = vpack.c.b16 %v1478, %v1472
    %v1695 = vpack.c.b16 %v1479, %v1473
    %v1696 = vpack.c.b16 %v1480, %v1474
    %v1697 = vpack.c.b16 %v1481, %v1475
    %v1698 = vpack.c.b16 %v1488, %v1482
    %v1699 = vpack.c.b16 %v1489, %v1483
    %v1700 = vpack.c.b16 %v1490, %v1484
    %v1701 = vpack.c.b16 %v1491, %v1485
    %v1702 = vpack.c.b16 %v1492, %v1486
    %v1703 = vpack.c.b16 %v1493, %v1487
    %v1704 = vpack.c.b16 %v1500, %v1494
    %v1705 = vpack.c.b16 %v1501, %v1495
    %v1706 = vpack.c.b16 %v1502, %v1496
    %v1707 = vpack.c.b16 %v1503, %v1497
    %v1708 = vpack.c.b16 %v1504, %v1498
    %v1709 = vpack.c.b16 %v1505, %v1499
    %v1710 = vpack.c.b16 %v1512, %v1506
    %v1711 = vpack.c.b16 %v1513, %v1507
    %v1712 = vpack.c.b16 %v1514, %v1508
    %v1713 = vpack.c.b16 %v1515, %v1509
    %v1714 = vpack.c.b16 %v1516, %v1510
    %v1715 = vpack.c.b16 %v1517, %v1511
    %v1716 = vpack.c.b16 %v1524, %v1518
    %v1717 = vpack.c.b16 %v1525, %v1519
    %v1718 = vpack.c.b16 %v1526, %v1520
    %v1719 = vpack.c.b16 %v1527, %v1521
    %v1720 = vpack.c.b16 %v1528, %v1522
    %v1721 = vpack.c.b16 %v1529, %v1523
    %1914 = vmatprep.subr.bf16.mxu0 %v1531
    %1915 = vmatpush1.bf16.msra.mxu0 %v1530
    %1916 = vmatprep.subr.bf16.mxu0 %v1537
    %1917 = vmatpush1.bf16.msra.mxu0 %v1536
    %1918 = vmatprep.subr.bf16.mxu0 %v1543
    %1919 = vmatpush1.bf16.msra.mxu0 %v1542
    %1920 = vmatprep.subr.bf16.mxu0 %v1549
    %1921 = vmatpush1.bf16.msra.mxu0 %v1548
    %1922 = vmatprep.subr.bf16.mxu0 %v1555
    %1923 = vmatpush1.bf16.msra.mxu0 %v1554
    %1924 = vmatprep.subr.bf16.mxu0 %v1561
    %1925 = vmatpush1.bf16.msra.mxu0 %v1560
    %1926 = vmatprep.subr.bf16.mxu0 %v1567
    %1927 = vmatpush1.bf16.msra.mxu0 %v1566
    %1928 = vmatprep.subr.bf16.mxu0 %v1573
    %1929 = vmatpush1.bf16.msra.mxu0 %v1572
    %1930 = vmatprep.subr.bf16.mxu0 %v1579
    %1931 = vmatpush1.bf16.msra.mxu0 %v1578
    %1932 = vmatprep.subr.bf16.mxu0 %v1585
    %1933 = vmatpush1.bf16.msra.mxu0 %v1584
    %1934 = vmatprep.subr.bf16.mxu0 %v1591
    %1935 = vmatpush1.bf16.msra.mxu0 %v1590
    %1936 = vmatprep.subr.bf16.mxu0 %v1597
    %1937 = vmatpush1.bf16.msra.mxu0 %v1596
    %1938 = vmatprep.subr.bf16.mxu0 %v1603
    %1939 = vmatpush1.bf16.msra.mxu0 %v1602
    %1940 = vmatprep.subr.bf16.mxu0 %v1609
    %1941 = vmatpush1.bf16.msra.mxu0 %v1608
    %1942 = vmatprep.subr.bf16.mxu0 %v1615
    %1943 = vmatpush1.bf16.msra.mxu0 %v1614
    %1944 = vmatprep.subr.bf16.mxu0 %v1621
    %1945 = vmatpush1.bf16.msra.mxu0 %v1620
    %1946 = vmatprep.mubr.bf16.mxu0 %v727
    %1947 = vmatmul.mubr.bf16.gmra.mrb[0].mxu0 %v726
    %v1948 = vpop.f32.mrb[0].mxu0
    %v1949 = vadd.f32 %v927, %v1948
    %v1950 = vpop.f32.mrb[0].mxu0
    %v1951 = vadd.f32 %v931, %v1950
    %v1952 = vpop.f32.mrb[0].mxu0
    %v1953 = vadd.f32 %v927, %v1952
    %v1954 = vpop.f32.mrb[0].mxu0
    %v1955 = vadd.f32 %v931, %v1954
    %1956 = vdwg.mxu0
    %1957 = vmatprep.subr.bf16.mxu0 %v1627
    %1958 = vmatpush1.bf16.msra.mxu0 %v1626
    %1959 = vmatprep.subr.bf16.mxu0 %v1633
    %1960 = vmatpush1.bf16.msra.mxu0 %v1632
    %1961 = vmatprep.subr.bf16.mxu0 %v1639
    %1962 = vmatpush1.bf16.msra.mxu0 %v1638
    %1963 = vmatprep.subr.bf16.mxu0 %v1645
    %1964 = vmatpush1.bf16.msra.mxu0 %v1644
    %1965 = vmatprep.subr.bf16.mxu0 %v1651
    %1966 = vmatpush1.bf16.msra.mxu0 %v1650
    %1967 = vmatprep.subr.bf16.mxu0 %v1657
    %1968 = vmatpush1.bf16.msra.mxu0 %v1656
    %1969 = vmatprep.subr.bf16.mxu0 %v1663
    %1970 = vmatpush1.bf16.msra.mxu0 %v1662
    %1971 = vmatprep.subr.bf16.mxu0 %v1669
    %1972 = vmatpush1.bf16.msra.mxu0 %v1668
    %1973 = vmatprep.subr.bf16.mxu0 %v1675
    %1974 = vmatpush1.bf16.msra.mxu0 %v1674
    %1975 = vmatprep.subr.bf16.mxu0 %v1681
    %1976 = vmatpush1.bf16.msra.mxu0 %v1680
    %1977 = vmatprep.subr.bf16.mxu0 %v1687
    %1978 = vmatpush1.bf16.msra.mxu0 %v1686
    %1979 = vmatprep.subr.bf16.mxu0 %v1693
    %1980 = vmatpush1.bf16.msra.mxu0 %v1692
    %1981 = vmatprep.subr.bf16.mxu0 %v1699
    %1982 = vmatpush1.bf16.msra.mxu0 %v1698
    %1983 = vmatprep.subr.bf16.mxu0 %v1705
    %1984 = vmatpush1.bf16.msra.mxu0 %v1704
    %1985 = vmatprep.subr.bf16.mxu0 %v1711
    %1986 = vmatpush1.bf16.msra.mxu0 %v1710
    %1987 = vmatprep.subr.bf16.mxu0 %v1717
    %1988 = vmatpush1.bf16.msra.mxu0 %v1716
    %1989 = vmatprep.mubr.bf16.mxu0 %v729
    %1990 = vmatmul.mubr.bf16.gmra.mrb[0].mxu0 %v728
    %v1991 = vpop.f32.mrb[0].mxu0
    %v1992 = vadd.f32 %v1949, %v1991
    %v1993 = vpop.f32.mrb[0].mxu0
    %v1994 = vadd.f32 %v1951, %v1993
    %v1995 = vpop.f32.mrb[0].mxu0
    %v1996 = vadd.f32 %v1953, %v1995
    %v1997 = vpop.f32.mrb[0].mxu0
    %v1998 = vadd.f32 %v1955, %v1997
    %1999 = vdwg.mxu0
    %2000 = vmatprep.subr.bf16.mxu0 %v1533
    %2001 = vmatpush1.bf16.msra.mxu0 %v1532
    %2002 = vmatprep.subr.bf16.mxu0 %v1539
    %2003 = vmatpush1.bf16.msra.mxu0 %v1538
    %2004 = vmatprep.subr.bf16.mxu0 %v1545
    %2005 = vmatpush1.bf16.msra.mxu0 %v1544
    %2006 = vmatprep.subr.bf16.mxu0 %v1551
    %2007 = vmatpush1.bf16.msra.mxu0 %v1550
    %2008 = vmatprep.subr.bf16.mxu0 %v1557
    %2009 = vmatpush1.bf16.msra.mxu0 %v1556
    %2010 = vmatprep.subr.bf16.mxu0 %v1563
    %2011 = vmatpush1.bf16.msra.mxu0 %v1562
    %2012 = vmatprep.subr.bf16.mxu0 %v1569
    %2013 = vmatpush1.bf16.msra.mxu0 %v1568
    %2014 = vmatprep.subr.bf16.mxu0 %v1575
    %2015 = vmatpush1.bf16.msra.mxu0 %v1574
    %2016 = vmatprep.subr.bf16.mxu0 %v1581
    %2017 = vmatpush1.bf16.msra.mxu0 %v1580
    %2018 = vmatprep.subr.bf16.mxu0 %v1587
    %2019 = vmatpush1.bf16.msra.mxu0 %v1586
    %2020 = vmatprep.subr.bf16.mxu0 %v1593
    %2021 = vmatpush1.bf16.msra.mxu0 %v1592
    %2022 = vmatprep.subr.bf16.mxu0 %v1599
    %2023 = vmatpush1.bf16.msra.mxu0 %v1598
    %2024 = vmatprep.subr.bf16.mxu0 %v1605
    %2025 = vmatpush1.bf16.msra.mxu0 %v1604
    %2026 = vmatprep.subr.bf16.mxu0 %v1611
    %2027 = vmatpush1.bf16.msra.mxu0 %v1610
    %2028 = vmatprep.subr.bf16.mxu0 %v1617
    %2029 = vmatpush1.bf16.msra.mxu0 %v1616
    %2030 = vmatprep.subr.bf16.mxu0 %v1623
    %2031 = vmatpush1.bf16.msra.mxu0 %v1622
    %2032 = vmatprep.mubr.bf16.mxu0 %v727
    %2033 = vmatmul.mubr.bf16.gmra.mrb[0].mxu0 %v726
    %v2034 = vpop.f32.mrb[0].mxu0
    %v2035 = vadd.f32 %v935, %v2034
    %v2036 = vpop.f32.mrb[0].mxu0
    %v2037 = vadd.f32 %v939, %v2036
    %v2038 = vpop.f32.mrb[0].mxu0
    %v2039 = vadd.f32 %v935, %v2038
    %v2040 = vpop.f32.mrb[0].mxu0
    %v2041 = vadd.f32 %v939, %v2040
    %2042 = vdwg.mxu0
    %2043 = vmatprep.subr.bf16.mxu0 %v1629
    %2044 = vmatpush1.bf16.msra.mxu0 %v1628
    %2045 = vmatprep.subr.bf16.mxu0 %v1635
    %2046 = vmatpush1.bf16.msra.mxu0 %v1634
    %2047 = vmatprep.subr.bf16.mxu0 %v1641
    %2048 = vmatpush1.bf16.msra.mxu0 %v1640
    %2049 = vmatprep.subr.bf16.mxu0 %v1647
    %2050 = vmatpush1.bf16.msra.mxu0 %v1646
    %2051 = vmatprep.subr.bf16.mxu0 %v1653
    %2052 = vmatpush1.bf16.msra.mxu0 %v1652
    %2053 = vmatprep.subr.bf16.mxu0 %v1659
    %2054 = vmatpush1.bf16.msra.mxu0 %v1658
    %2055 = vmatprep.subr.bf16.mxu0 %v1665
    %2056 = vmatpush1.bf16.msra.mxu0 %v1664
    %2057 = vmatprep.subr.bf16.mxu0 %v1671
    %2058 = vmatpush1.bf16.msra.mxu0 %v1670
    %2059 = vmatprep.subr.bf16.mxu0 %v1677
    %2060 = vmatpush1.bf16.msra.mxu0 %v1676
    %2061 = vmatprep.subr.bf16.mxu0 %v1683
    %2062 = vmatpush1.bf16.msra.mxu0 %v1682
    %2063 = vmatprep.subr.bf16.mxu0 %v1689
    %2064 = vmatpush1.bf16.msra.mxu0 %v1688
    %2065 = vmatprep.subr.bf16.mxu0 %v1695
    %2066 = vmatpush1.bf16.msra.mxu0 %v1694
    %2067 = vmatprep.subr.bf16.mxu0 %v1701
    %2068 = vmatpush1.bf16.msra.mxu0 %v1700
    %2069 = vmatprep.subr.bf16.mxu0 %v1707
    %2070 = vmatpush1.bf16.msra.mxu0 %v1706
    %2071 = vmatprep.subr.bf16.mxu0 %v1713
    %2072 = vmatpush1.bf16.msra.mxu0 %v1712
    %2073 = vmatprep.subr.bf16.mxu0 %v1719
    %2074 = vmatpush1.bf16.msra.mxu0 %v1718
    %2075 = vmatprep.mubr.bf16.mxu0 %v729
    %2076 = vmatmul.mubr.bf16.gmra.mrb[0].mxu0 %v728
    %v2077 = vpop.f32.mrb[0].mxu0
    %v2078 = vadd.f32 %v2035, %v2077
    %v2079 = vpop.f32.mrb[0].mxu0
    %v2080 = vadd.f32 %v2037, %v2079
    %v2081 = vpop.f32.mrb[0].mxu0
    %v2082 = vadd.f32 %v2039, %v2081
    %v2083 = vpop.f32.mrb[0].mxu0
    %v2084 = vadd.f32 %v2041, %v2083
    %2085 = vdwg.mxu0
    %2086 = vmatprep.subr.bf16.mxu0 %v1535
    %2087 = vmatpush1.bf16.msra.mxu0 %v1534
    %2088 = vmatprep.subr.bf16.mxu0 %v1541
    %2089 = vmatpush1.bf16.msra.mxu0 %v1540
    %2090 = vmatprep.subr.bf16.mxu0 %v1547
    %2091 = vmatpush1.bf16.msra.mxu0 %v1546
    %2092 = vmatprep.subr.bf16.mxu0 %v1553
    %2093 = vmatpush1.bf16.msra.mxu0 %v1552
    %2094 = vmatprep.subr.bf16.mxu0 %v1559
    %2095 = vmatpush1.bf16.msra.mxu0 %v1558
    %2096 = vmatprep.subr.bf16.mxu0 %v1565
    %2097 = vmatpush1.bf16.msra.mxu0 %v1564
    %2098 = vmatprep.subr.bf16.mxu0 %v1571
    %2099 = vmatpush1.bf16.msra.mxu0 %v1570
    %2100 = vmatprep.subr.bf16.mxu0 %v1577
    %2101 = vmatpush1.bf16.msra.mxu0 %v1576
    %2102 = vmatprep.subr.bf16.mxu0 %v1583
    %2103 = vmatpush1.bf16.msra.mxu0 %v1582
    %2104 = vmatprep.subr.bf16.mxu0 %v1589
    %2105 = vmatpush1.bf16.msra.mxu0 %v1588
    %2106 = vmatprep.subr.bf16.mxu0 %v1595
    %2107 = vmatpush1.bf16.msra.mxu0 %v1594
    %2108 = vmatprep.subr.bf16.mxu0 %v1601
    %2109 = vmatpush1.bf16.msra.mxu0 %v1600
    %2110 = vmatprep.subr.bf16.mxu0 %v1607
    %2111 = vmatpush1.bf16.msra.mxu0 %v1606
    %2112 = vmatprep.subr.bf16.mxu0 %v1613
    %2113 = vmatpush1.bf16.msra.mxu0 %v1612
    %2114 = vmatprep.subr.bf16.mxu0 %v1619
    %2115 = vmatpush1.bf16.msra.mxu0 %v1618
    %2116 = vmatprep.subr.bf16.mxu0 %v1625
    %2117 = vmatpush1.bf16.msra.mxu0 %v1624
    %2118 = vmatprep.mubr.bf16.mxu0 %v727
    %2119 = vmatmul.mubr.bf16.gmra.mrb[0].mxu0 %v726
    %v2120 = vpop.f32.mrb[0].mxu0
    %v2121 = vadd.f32 %v943, %v2120
    %v2122 = vpop.f32.mrb[0].mxu0
    %v2123 = vadd.f32 %v947, %v2122
    %v2124 = vpop.f32.mrb[0].mxu0
    %v2125 = vadd.f32 %v943, %v2124
    %v2126 = vpop.f32.mrb[0].mxu0
    %v2127 = vadd.f32 %v947, %v2126
    %2128 = vdwg.mxu0
    %2129 = vmatprep.subr.bf16.mxu0 %v1631
    %2130 = vmatpush1.bf16.msra.mxu0 %v1630
    %2131 = vmatprep.subr.bf16.mxu0 %v1637
    %2132 = vmatpush1.bf16.msra.mxu0 %v1636
    %2133 = vmatprep.subr.bf16.mxu0 %v1643
    %2134 = vmatpush1.bf16.msra.mxu0 %v1642
    %2135 = vmatprep.subr.bf16.mxu0 %v1649
    %2136 = vmatpush1.bf16.msra.mxu0 %v1648
    %2137 = vmatprep.subr.bf16.mxu0 %v1655
    %2138 = vmatpush1.bf16.msra.mxu0 %v1654
    %2139 = vmatprep.subr.bf16.mxu0 %v1661
    %2140 = vmatpush1.bf16.msra.mxu0 %v1660
    %2141 = vmatprep.subr.bf16.mxu0 %v1667
    %2142 = vmatpush1.bf16.msra.mxu0 %v1666
    %2143 = vmatprep.subr.bf16.mxu0 %v1673
    %2144 = vmatpush1.bf16.msra.mxu0 %v1672
    %2145 = vmatprep.subr.bf16.mxu0 %v1679
    %2146 = vmatpush1.bf16.msra.mxu0 %v1678
    %2147 = vmatprep.subr.bf16.mxu0 %v1685
    %2148 = vmatpush1.bf16.msra.mxu0 %v1684
    %2149 = vmatprep.subr.bf16.mxu0 %v1691
    %2150 = vmatpush1.bf16.msra.mxu0 %v1690
    %2151 = vmatprep.subr.bf16.mxu0 %v1697
    %2152 = vmatpush1.bf16.msra.mxu0 %v1696
    %2153 = vmatprep.subr.bf16.mxu0 %v1703
    %2154 = vmatpush1.bf16.msra.mxu0 %v1702
    %2155 = vmatprep.subr.bf16.mxu0 %v1709
    %2156 = vmatpush1.bf16.msra.mxu0 %v1708
    %2157 = vmatprep.subr.bf16.mxu0 %v1715
    %2158 = vmatpush1.bf16.msra.mxu0 %v1714
    %2159 = vmatprep.subr.bf16.mxu0 %v1721
    %2160 = vmatpush1.bf16.msra.mxu0 %v1720
    %2161 = vmatprep.mubr.bf16.mxu0 %v729
    %2162 = vmatmul.mubr.bf16.gmra.mrb[0].mxu0 %v728
    %v2163 = vpop.f32.mrb[0].mxu0
    %v2164 = vadd.f32 %v2121, %v2163
    %v2165 = vpop.f32.mrb[0].mxu0
    %v2166 = vadd.f32 %v2123, %v2165
    %v2167 = vpop.f32.mrb[0].mxu0
    %v2168 = vadd.f32 %v2125, %v2167
    %v2169 = vpop.f32.mrb[0].mxu0
    %v2170 = vadd.f32 %v2127, %v2169
    %2171 = vdwg.mxu0
    %v2172 = vtanh.pop %v1992
    %v2173 = vtanh.pop %v1994
    %v2174 = vtanh.pop %v2078
    %v2175 = vtanh.pop %v2080
    %v2176 = vtanh.pop %v2164
    %v2177 = vtanh.pop %v2166
    %v2178 = vtanh.pop %v1996
    %v2179 = vtanh.pop %v1998
    %v2180 = vtanh.pop %v2082
    %v2181 = vtanh.pop %v2084
    %v2182 = vtanh.pop %v2168
    %v2183 = vtanh.pop %v2170
    %2184 = vst [vmem:[#allocation12] sm:$0xff] %v2172
    %2185 = vst [vmem:[#allocation12 + $0x8] sm:$0xff] %v2173
    %2186 = vst [vmem:[#allocation12 + $0x10] sm:$0xff] %v2174
    %2187 = vst [vmem:[#allocation12 + $0x18] sm:$0xff] %v2175
    %2188 = vst [vmem:[#allocation12 + $0x20] sm:$0xff] %v2176
    %2189 = vst [vmem:[#allocation12 + $0x28] sm:$0xff] %v2177
    %2190 = vst [vmem:[#allocation12 + $0x30] sm:$0xff] %v2178
    %2191 = vst [vmem:[#allocation12 + $0x38] sm:$0xff] %v2179
    %2192 = vst [vmem:[#allocation12 + $0x40] sm:$0xff] %v2180
    %2193 = vst [vmem:[#allocation12 + $0x48] sm:$0xff] %v2181
    %2194 = vst [vmem:[#allocation12 + $0x50] sm:$0xff] %v2182
    %2195 = vst [vmem:[#allocation12 + $0x58] sm:$0xff] %v2183
    // Predicated region
    $region54: #{tpu_custom_call.1} parent=1 // pred_check
      _
    $region55: #{tpu_custom_call.1} parent=1 // pred_check_branch
      %2197 = sbr.rel (0) target = $region57
    $region56: #{tpu_custom_call.1} parent=1 // pred_region
      %s2199 = ssub.s32 1536, 1536
      %2200 = vsyncadd [#allocation5], %s2199
      %s2201 = sshll.u32 [#allocation12], 4
      %s2202 = int_to_ptr.vmem [resolvable:$true] %s2201
      %2207 = dma.vmem_to_hbm [thread:$0]  %s2202, 1536, %s7, [#allocation5], 768, 768, 48
    $region57: #{tpu_custom_call.1} parent=1 // pred_fallthru
      _
    // Predicated region
    $region58: #{tpu_custom_call.1} parent=1 // pred_check
      _
    $region59: #{tpu_custom_call.1} parent=1 // pred_check_branch
      %2209 = sbr.rel (0) target = $region61
    $region60: #{tpu_custom_call.1} parent=1 // pred_region
      %2210 = dma.done [#allocation5], 1536
    $region61: #{tpu_custom_call.1} parent=1 // pred_fallthru
      _
    %2211 = vsyncpa [#allocation4], 1
    %2212 = vsyncpa [#allocation7], 1
    %2213 = vsyncpa [#allocation10], 1
    %2214 = vsyncpa [#allocation5], 1

</llo_original>
